<compile_context>
chip_gen: v6e
topology: v6e:2x2x1
jax: 0.10.0
libtpu: 0.0.40
codegen_flags: <defaults>
</compile_context>

<pallas_src>
import math
import jax
import jax.numpy as jnp
from jax.experimental import pallas as pl
from jax.experimental.pallas import tpu as pltpu

# ---- small config (consistent with SiglipVisionConfig fields) -------------
B = 2          # batch
S = 8          # seq_len (num image tokens)
D = 32         # hidden_size
H = 4          # num_attention_heads
DH = D // H    # head_dim
INTER = 64     # intermediate_size
EPS = 1e-6     # layer_norm_eps
SCALE = DH ** (-0.5)
BW = 3 * D     # packed-bias row width (widest bias = fused qkv bias)


def _layernorm(x, w, b):
    mu = jnp.mean(x, axis=-1, keepdims=True)
    var = jnp.mean((x - mu) ** 2, axis=-1, keepdims=True)
    return (x - mu) * jax.lax.rsqrt(var + EPS) * w + b


def _gelu_tanh(x):
    # torch.nn.functional.gelu(..., approximate='tanh')
    c = math.sqrt(2.0 / math.pi)
    return 0.5 * x * (1.0 + jnp.tanh(c * (x + 0.044715 * x * x * x)))


def _mm(a, b):
    # a:(M,K) @ b:(K,N) -> (M,N), fp32 accumulate on MXU
    return jax.lax.dot_general(a, b, (((1,), (0,)), ((), ())),
                               preferred_element_type=jnp.float32)


def encoder_layer_kernel(x_ref, wqkv_ref, wo_ref, w1_ref, w2_ref,
                         norms_ref, biases_ref, o_ref):
    # x_ref / o_ref: (S, D) blocks (batch dim squeezed by the BlockSpec).
    x = x_ref[...]

    ln1_w = norms_ref[0:1, :]
    ln1_b = norms_ref[1:2, :]
    ln2_w = norms_ref[2:3, :]
    ln2_b = norms_ref[3:4, :]

    # ---------------- layer_norm1 + fused QKV projection ----------------
    h = _layernorm(x, ln1_w, ln1_b)                        # (S, D)
    qkv = _mm(h, wqkv_ref[...]) + biases_ref[0:1, :]       # (S, 3D) lane-dense

    # ---- one-time heads -> leading-axis relayout (no narrow lane slices) ----
    # (S,3D) -T-> (3D,S) -row split-> (3H,DH,S) -minor swap-> (3H,S,DH)
    qkv_t = qkv.T.reshape(3 * H, DH, S)
    qkv_n = jnp.transpose(qkv_t, (0, 2, 1))                # (3H, S, DH)
    q3 = qkv_n[0:H]                                        # (H, S, DH)
    k3 = qkv_n[H:2 * H]                                    # (H, S, DH)
    v3 = qkv_n[2 * H:3 * H]                                # (H, S, DH)

    # ---------------- attention: all heads batched ----------------
    sc = jnp.einsum("hqd,hkd->hqk", q3, k3,
                    preferred_element_type=jnp.float32) * SCALE   # (H, S, S)
    sc = sc - jnp.max(sc, axis=-1, keepdims=True)
    p = jnp.exp(sc)
    l = jnp.sum(p, axis=-1, keepdims=True)
    pv = jnp.einsum("hqk,hkd->hqd", p, v3,
                    preferred_element_type=jnp.float32) / l        # (H, S, DH)

    # merge heads back to (S, D) with one relayout, then one out_proj matmul
    attn = jnp.transpose(pv, (0, 2, 1)).reshape(D, S).T             # (S, D)
    attn = _mm(attn, wo_ref[...]) + biases_ref[1:2, 0:D]

    h1 = x + attn                                           # residual 1

    # ---------------- layer_norm2 + MLP ----------------
    h2 = _layernorm(h1, ln2_w, ln2_b)
    f = _gelu_tanh(_mm(h2, w1_ref[...]) + biases_ref[2:3, 0:INTER])   # (S, INTER)
    out = h1 + _mm(f, w2_ref[...]) + biases_ref[3:4, 0:D]             # residual 2

    o_ref[...] = out.astype(o_ref.dtype)


def pack_params(params):
    """One-time (outside the per-call path) packing of the 13 raw params."""
    wqkv = jnp.concatenate([params["wq"], params["wk"], params["wv"]], axis=1)  # (D, 3D)
    bqkv = jnp.concatenate([params["bq"], params["bk"], params["bv"]], axis=1)  # (1, 3D)
    norms = jnp.concatenate([params["ln1_w"], params["ln1_b"],
                             params["ln2_w"], params["ln2_b"]], axis=0)         # (4, D)

    def row(b):
        return jnp.pad(b, ((0, 0), (0, BW - b.shape[1])))

    biases = jnp.concatenate([row(bqkv), row(params["bo"]),
                              row(params["b1"]), row(params["b2"])], axis=0)    # (4, 3D)
    return dict(wqkv=wqkv, wo=params["wo"], w1=params["w1"], w2=params["w2"],
                norms=norms, biases=biases)


def siglip_encoder_layer(x, packed):
    """x: (B, S, D) float32.  packed: output of pack_params (weights in (in,out))."""
    wqkv, wo, w1, w2 = packed["wqkv"], packed["wo"], packed["w1"], packed["w2"]
    norms, biases = packed["norms"], packed["biases"]

    def resident(shape):
        nd = len(shape)
        return pl.BlockSpec(shape, lambda b, _nd=nd: (0,) * _nd)   # VMEM-resident

    return pl.pallas_call(
        encoder_layer_kernel,
        out_shape=jax.ShapeDtypeStruct((B, S, D), x.dtype),
        grid_spec=pltpu.PrefetchScalarGridSpec(
            num_scalar_prefetch=0,
            grid=(B,),                                     # parallel over batch
            in_specs=[
                pl.BlockSpec((None, S, D), lambda b: (b, 0, 0)),   # activations stream
                resident(wqkv.shape), resident(wo.shape),
                resident(w1.shape), resident(w2.shape),
                resident(norms.shape), resident(biases.shape),
            ],
            out_specs=pl.BlockSpec((None, S, D), lambda b: (b, 0, 0)),
        ),
        compiler_params=pltpu.CompilerParams(
            dimension_semantics=("parallel",)),            # use both TCs on v7x
    )(x, wqkv, wo, w1, w2, norms, biases)


def _init_params(key):
    ks = jax.random.split(key, 12)

    def lin(k, n_in, n_out, scale=0.05):
        kw, kb = jax.random.split(k)
        w = scale * jax.random.normal(kw, (n_in, n_out), jnp.float32)  # (in,out)
        b = scale * jax.random.normal(kb, (1, n_out), jnp.float32)     # row vec
        return w, b

    wq, bq = lin(ks[0], D, D)
    wk, bk = lin(ks[1], D, D)
    wv, bv = lin(ks[2], D, D)
    wo, bo = lin(ks[3], D, D)
    w1, b1 = lin(ks[4], D, INTER)
    w2, b2 = lin(ks[5], INTER, D)
    ln1_w = jnp.ones((1, D), jnp.float32) + 0.01 * jax.random.normal(ks[6], (1, D))
    ln1_b = 0.01 * jax.random.normal(ks[7], (1, D), jnp.float32)
    ln2_w = jnp.ones((1, D), jnp.float32) + 0.01 * jax.random.normal(ks[8], (1, D))
    ln2_b = 0.01 * jax.random.normal(ks[9], (1, D), jnp.float32)
    return dict(wq=wq, bq=bq, wk=wk, bk=bk, wv=wv, bv=bv, wo=wo, bo=bo,
                w1=w1, b1=b1, w2=w2, b2=b2,
                ln1_w=ln1_w, ln1_b=ln1_b, ln2_w=ln2_w, ln2_b=ln2_b)


def _reference(x, p):
    """Pure-JAX reference mirroring the PyTorch forward."""
    def ln(v, w, b):
        mu = v.mean(-1, keepdims=True)
        var = ((v - mu) ** 2).mean(-1, keepdims=True)
        return (v - mu) / jnp.sqrt(var + EPS) * w[0] + b[0]
    res = x
    h = ln(x, p["ln1_w"], p["ln1_b"])
    q = h @ p["wq"] + p["bq"][0]
    k = h @ p["wk"] + p["bk"][0]
    v = h @ p["wv"] + p["bv"][0]
    q = q.reshape(B, S, H, DH).transpose(0, 2, 1, 3)
    k = k.reshape(B, S, H, DH).transpose(0, 2, 1, 3)
    v = v.reshape(B, S, H, DH).transpose(0, 2, 1, 3)
    att = jnp.einsum("bhqd,bhkd->bhqk", q, k) * SCALE
    att = jax.nn.softmax(att.astype(jnp.float32), axis=-1)
    o = jnp.einsum("bhqk,bhkd->bhqd", att, v).transpose(0, 2, 1, 3).reshape(B, S, D)
    o = o @ p["wo"] + p["bo"][0]
    h = o + res
    res = h
    h2 = ln(h, p["ln2_w"], p["ln2_b"])
    f = h2 @ p["w1"] + p["b1"][0]
    c = math.sqrt(2.0 / math.pi)
    f = 0.5 * f * (1.0 + jnp.tanh(c * (f + 0.044715 * f ** 3)))
    f = f @ p["w2"] + p["b2"][0]
    return res + f


if __name__ == "__main__":
    key = jax.random.PRNGKey(0)
    kx, kp = jax.random.split(key)
    x = jax.random.normal(kx, (B, S, D), jnp.float32)
    params = _init_params(kp)
    packed = pack_params(params)            # one-time fuse/pack, not per call

    layer = jax.jit(siglip_encoder_layer)
    out = jax.block_until_ready(layer(x, packed))

    ref = _reference(x, params)
    assert out.shape == (B, S, D)
    err = jnp.max(jnp.abs(out - ref))
    assert jnp.allclose(out, ref, rtol=1e-4, atol=1e-4), f"max err {err}"
    print("KERNEL_OK")
</pallas_src>

<mosaic_0001>
module attributes {stable_mosaic.version = 11 : i64} {
  func.func @encoder_layer_kernel(%arg0: i32, %arg1: memref<1x8x32xf32, #tpu.memory_space<vmem>>, %arg2: memref<32x96xf32, #tpu.memory_space<vmem>>, %arg3: memref<32x32xf32, #tpu.memory_space<vmem>>, %arg4: memref<32x64xf32, #tpu.memory_space<vmem>>, %arg5: memref<64x32xf32, #tpu.memory_space<vmem>>, %arg6: memref<4x32xf32, #tpu.memory_space<vmem>>, %arg7: memref<4x96xf32, #tpu.memory_space<vmem>>, %arg8: memref<1x8x32xf32, #tpu.memory_space<vmem>>) attributes {dimension_semantics = [#tpu.dimension_semantics<parallel>], iteration_bounds = array<i64: 2>, scalar_prefetch = 0 : i64, scratch_operands = 0 : i64, tpu.core_type = #tpu.core_type<tc>, window_params = [{transform_indices = @transform_0, window_bounds = array<i64: 1, 8, 32>}, {pipeline_mode = #tpu.pipeline_mode<synchronous>, transform_indices = @transform_1, window_bounds = array<i64: 32, 96>}, {pipeline_mode = #tpu.pipeline_mode<synchronous>, transform_indices = @transform_2, window_bounds = array<i64: 32, 32>}, {pipeline_mode = #tpu.pipeline_mode<synchronous>, transform_indices = @transform_3, window_bounds = array<i64: 32, 64>}, {pipeline_mode = #tpu.pipeline_mode<synchronous>, transform_indices = @transform_4, window_bounds = array<i64: 64, 32>}, {pipeline_mode = #tpu.pipeline_mode<synchronous>, transform_indices = @transform_5, window_bounds = array<i64: 4, 32>}, {pipeline_mode = #tpu.pipeline_mode<synchronous>, transform_indices = @transform_6, window_bounds = array<i64: 4, 96>}, {transform_indices = @transform_7, window_bounds = array<i64: 1, 8, 32>}]} {
    %c0 = arith.constant 0 : index
    %c0_0 = arith.constant 0 : index
    %c0_1 = arith.constant 0 : index
    %0 = vector.load %arg1[%c0, %c0_0, %c0_1] : memref<1x8x32xf32, #tpu.memory_space<vmem>>, vector<1x8x32xf32>
    %1 = vector.shape_cast %0 : vector<1x8x32xf32> to vector<8x32xf32>
    %c0_2 = arith.constant 0 : index
    %c0_3 = arith.constant 0 : index
    %2 = vector.load %arg6[%c0_2, %c0_3] : memref<4x32xf32, #tpu.memory_space<vmem>>, vector<1x32xf32>
    %c1 = arith.constant 1 : index
    %c0_4 = arith.constant 0 : index
    %3 = vector.load %arg6[%c1, %c0_4] : memref<4x32xf32, #tpu.memory_space<vmem>>, vector<1x32xf32>
    %c2 = arith.constant 2 : index
    %c0_5 = arith.constant 0 : index
    %4 = vector.load %arg6[%c2, %c0_5] : memref<4x32xf32, #tpu.memory_space<vmem>>, vector<1x32xf32>
    %c3 = arith.constant 3 : index
    %c0_6 = arith.constant 0 : index
    %5 = vector.load %arg6[%c3, %c0_6] : memref<4x32xf32, #tpu.memory_space<vmem>>, vector<1x32xf32>
    %cst = arith.constant dense<0.000000e+00> : vector<8xf32>
    %6 = vector.multi_reduction <add>, %1, %cst [1] : vector<8x32xf32> to vector<8xf32>
    %7 = vector.shape_cast %6 : vector<8xf32> to vector<8x1xf32>
    %cst_7 = arith.constant 3.200000e+01 : f32
    %8 = vector.broadcast %cst_7 : f32 to vector<8x1xf32>
    %9 = arith.divf %7, %8 : vector<8x1xf32>
    %10 = vector.broadcast %9 : vector<8x1xf32> to vector<8x32xf32>
    %11 = arith.subf %1, %10 : vector<8x32xf32>
    %12 = arith.mulf %11, %11 : vector<8x32xf32>
    %cst_8 = arith.constant dense<0.000000e+00> : vector<8xf32>
    %13 = vector.multi_reduction <add>, %12, %cst_8 [1] : vector<8x32xf32> to vector<8xf32>
    %14 = vector.shape_cast %13 : vector<8xf32> to vector<8x1xf32>
    %cst_9 = arith.constant 3.200000e+01 : f32
    %15 = vector.broadcast %cst_9 : f32 to vector<8x1xf32>
    %16 = arith.divf %14, %15 : vector<8x1xf32>
    %17 = vector.broadcast %9 : vector<8x1xf32> to vector<8x32xf32>
    %18 = arith.subf %1, %17 : vector<8x32xf32>
    %cst_10 = arith.constant 9.99999997E-7 : f32
    %19 = vector.broadcast %cst_10 : f32 to vector<8x1xf32>
    %20 = arith.addf %16, %19 : vector<8x1xf32>
    %21 = math.rsqrt %20 : vector<8x1xf32>
    %22 = vector.broadcast %21 : vector<8x1xf32> to vector<8x32xf32>
    %23 = arith.mulf %18, %22 : vector<8x32xf32>
    %24 = vector.broadcast %2 : vector<1x32xf32> to vector<8x32xf32>
    %25 = arith.mulf %23, %24 : vector<8x32xf32>
    %26 = vector.broadcast %3 : vector<1x32xf32> to vector<8x32xf32>
    %27 = arith.addf %25, %26 : vector<8x32xf32>
    %c0_11 = arith.constant 0 : index
    %c0_12 = arith.constant 0 : index
    %28 = vector.load %arg2[%c0_11, %c0_12] : memref<32x96xf32, #tpu.memory_space<vmem>>, vector<32x96xf32>
    %cst_13 = arith.constant dense<0.000000e+00> : vector<8x96xf32>
    %29 = tpu.matmul %27, %28, %cst_13 {dimension_numbers = #tpu.dot_dimension_numbers<[1], [0], [0], [1], [0, 0, 1, 1], [], []>} : vector<8x32xf32>, vector<32x96xf32>, vector<8x96xf32> -> vector<8x96xf32>
    %c0_14 = arith.constant 0 : index
    %c0_15 = arith.constant 0 : index
    %30 = vector.load %arg7[%c0_14, %c0_15] : memref<4x96xf32, #tpu.memory_space<vmem>>, vector<1x96xf32>
    %31 = vector.broadcast %30 : vector<1x96xf32> to vector<8x96xf32>
    %32 = arith.addf %29, %31 : vector<8x96xf32>
    %33 = tpu.transpose %32, [1, 0] : vector<8x96xf32> -> vector<96x8xf32>
    %34 = vector.shape_cast %33 : vector<96x8xf32> to vector<12x8x8xf32>
    %35 = tpu.transpose %34, [0, 2, 1] : vector<12x8x8xf32> -> vector<12x8x8xf32>
    %36 = vector.extract_strided_slice %35 {offsets = [0, 0, 0], sizes = [4, 8, 8], strides = [1, 1, 1]} : vector<12x8x8xf32> to vector<4x8x8xf32>
    %37 = vector.extract_strided_slice %35 {offsets = [4, 0, 0], sizes = [4, 8, 8], strides = [1, 1, 1]} : vector<12x8x8xf32> to vector<4x8x8xf32>
    %38 = vector.extract_strided_slice %35 {offsets = [8, 0, 0], sizes = [4, 8, 8], strides = [1, 1, 1]} : vector<12x8x8xf32> to vector<4x8x8xf32>
    "tpu.trace_start"() <{level = 10 : i32, message = "hqd,hkd->hqk"}> : () -> ()
    %cst_16 = arith.constant dense<0.000000e+00> : vector<4x8x8xf32>
    %39 = tpu.matmul %36, %37, %cst_16 {dimension_numbers = #tpu.dot_dimension_numbers<[2], [2], [1], [1], [0, 0, 0, 1, 1, 1], [0], [0]>} : vector<4x8x8xf32>, vector<4x8x8xf32>, vector<4x8x8xf32> -> vector<4x8x8xf32>
    "tpu.trace_stop"() : () -> ()
    %cst_17 = arith.constant 0.353553385 : f32
    %40 = vector.broadcast %cst_17 : f32 to vector<4x8x8xf32>
    %41 = arith.mulf %39, %40 : vector<4x8x8xf32>
    %cst_18 = arith.constant dense<0xFF800000> : vector<4x8xf32>
    %42 = vector.multi_reduction <maximumf>, %41, %cst_18 [2] : vector<4x8x8xf32> to vector<4x8xf32>
    %43 = vector.shape_cast %42 : vector<4x8xf32> to vector<4x8x1xf32>
    %44 = vector.broadcast %43 : vector<4x8x1xf32> to vector<4x8x8xf32>
    %45 = arith.subf %41, %44 : vector<4x8x8xf32>
    %46 = math.exp %45 : vector<4x8x8xf32>
    %cst_19 = arith.constant dense<0.000000e+00> : vector<4x8xf32>
    %47 = vector.multi_reduction <add>, %46, %cst_19 [2] : vector<4x8x8xf32> to vector<4x8xf32>
    %48 = vector.shape_cast %47 : vector<4x8xf32> to vector<4x8x1xf32>
    "tpu.trace_start"() <{level = 10 : i32, message = "hqk,hkd->hqd"}> : () -> ()
    %cst_20 = arith.constant dense<0.000000e+00> : vector<4x8x8xf32>
    %49 = tpu.matmul %46, %38, %cst_20 {dimension_numbers = #tpu.dot_dimension_numbers<[2], [1], [1], [2], [0, 0, 0, 1, 1, 2], [0], [0]>} : vector<4x8x8xf32>, vector<4x8x8xf32>, vector<4x8x8xf32> -> vector<4x8x8xf32>
    "tpu.trace_stop"() : () -> ()
    %50 = vector.broadcast %48 : vector<4x8x1xf32> to vector<4x8x8xf32>
    %51 = arith.divf %49, %50 : vector<4x8x8xf32>
    %52 = tpu.transpose %51, [0, 2, 1] : vector<4x8x8xf32> -> vector<4x8x8xf32>
    %53 = vector.shape_cast %52 : vector<4x8x8xf32> to vector<32x8xf32>
    %54 = tpu.transpose %53, [1, 0] : vector<32x8xf32> -> vector<8x32xf32>
    %c0_21 = arith.constant 0 : index
    %c0_22 = arith.constant 0 : index
    %55 = vector.load %arg3[%c0_21, %c0_22] : memref<32x32xf32, #tpu.memory_space<vmem>>, vector<32x32xf32>
    %cst_23 = arith.constant dense<0.000000e+00> : vector<8x32xf32>
    %56 = tpu.matmul %54, %55, %cst_23 {dimension_numbers = #tpu.dot_dimension_numbers<[1], [0], [0], [1], [0, 0, 1, 1], [], []>} : vector<8x32xf32>, vector<32x32xf32>, vector<8x32xf32> -> vector<8x32xf32>
    %c1_24 = arith.constant 1 : index
    %c0_25 = arith.constant 0 : index
    %57 = vector.load %arg7[%c1_24, %c0_25] : memref<4x96xf32, #tpu.memory_space<vmem>>, vector<1x32xf32>
    %58 = vector.broadcast %57 : vector<1x32xf32> to vector<8x32xf32>
    %59 = arith.addf %56, %58 : vector<8x32xf32>
    %60 = arith.addf %1, %59 : vector<8x32xf32>
    %cst_26 = arith.constant dense<0.000000e+00> : vector<8xf32>
    %61 = vector.multi_reduction <add>, %60, %cst_26 [1] : vector<8x32xf32> to vector<8xf32>
    %62 = vector.shape_cast %61 : vector<8xf32> to vector<8x1xf32>
    %cst_27 = arith.constant 3.200000e+01 : f32
    %63 = vector.broadcast %cst_27 : f32 to vector<8x1xf32>
    %64 = arith.divf %62, %63 : vector<8x1xf32>
    %65 = vector.broadcast %64 : vector<8x1xf32> to vector<8x32xf32>
    %66 = arith.subf %60, %65 : vector<8x32xf32>
    %67 = arith.mulf %66, %66 : vector<8x32xf32>
    %cst_28 = arith.constant dense<0.000000e+00> : vector<8xf32>
    %68 = vector.multi_reduction <add>, %67, %cst_28 [1] : vector<8x32xf32> to vector<8xf32>
    %69 = vector.shape_cast %68 : vector<8xf32> to vector<8x1xf32>
    %cst_29 = arith.constant 3.200000e+01 : f32
    %70 = vector.broadcast %cst_29 : f32 to vector<8x1xf32>
    %71 = arith.divf %69, %70 : vector<8x1xf32>
    %72 = vector.broadcast %64 : vector<8x1xf32> to vector<8x32xf32>
    %73 = arith.subf %60, %72 : vector<8x32xf32>
    %cst_30 = arith.constant 9.99999997E-7 : f32
    %74 = vector.broadcast %cst_30 : f32 to vector<8x1xf32>
    %75 = arith.addf %71, %74 : vector<8x1xf32>
    %76 = math.rsqrt %75 : vector<8x1xf32>
    %77 = vector.broadcast %76 : vector<8x1xf32> to vector<8x32xf32>
    %78 = arith.mulf %73, %77 : vector<8x32xf32>
    %79 = vector.broadcast %4 : vector<1x32xf32> to vector<8x32xf32>
    %80 = arith.mulf %78, %79 : vector<8x32xf32>
    %81 = vector.broadcast %5 : vector<1x32xf32> to vector<8x32xf32>
    %82 = arith.addf %80, %81 : vector<8x32xf32>
    %c0_31 = arith.constant 0 : index
    %c0_32 = arith.constant 0 : index
    %83 = vector.load %arg4[%c0_31, %c0_32] : memref<32x64xf32, #tpu.memory_space<vmem>>, vector<32x64xf32>
    %cst_33 = arith.constant dense<0.000000e+00> : vector<8x64xf32>
    %84 = tpu.matmul %82, %83, %cst_33 {dimension_numbers = #tpu.dot_dimension_numbers<[1], [0], [0], [1], [0, 0, 1, 1], [], []>} : vector<8x32xf32>, vector<32x64xf32>, vector<8x64xf32> -> vector<8x64xf32>
    %c2_34 = arith.constant 2 : index
    %c0_35 = arith.constant 0 : index
    %85 = vector.load %arg7[%c2_34, %c0_35] : memref<4x96xf32, #tpu.memory_space<vmem>>, vector<1x64xf32>
    %86 = vector.broadcast %85 : vector<1x64xf32> to vector<8x64xf32>
    %87 = arith.addf %84, %86 : vector<8x64xf32>
    %cst_36 = arith.constant 5.000000e-01 : f32
    %88 = vector.broadcast %cst_36 : f32 to vector<8x64xf32>
    %89 = arith.mulf %88, %87 : vector<8x64xf32>
    %cst_37 = arith.constant 4.471500e-02 : f32
    %90 = vector.broadcast %cst_37 : f32 to vector<8x64xf32>
    %91 = arith.mulf %90, %87 : vector<8x64xf32>
    %92 = arith.mulf %91, %87 : vector<8x64xf32>
    %93 = arith.mulf %92, %87 : vector<8x64xf32>
    %94 = arith.addf %87, %93 : vector<8x64xf32>
    %cst_38 = arith.constant 0.797884583 : f32
    %95 = vector.broadcast %cst_38 : f32 to vector<8x64xf32>
    %96 = arith.mulf %95, %94 : vector<8x64xf32>
    %97 = math.tanh %96 : vector<8x64xf32>
    %cst_39 = arith.constant 1.000000e+00 : f32
    %98 = vector.broadcast %cst_39 : f32 to vector<8x64xf32>
    %99 = arith.addf %98, %97 : vector<8x64xf32>
    %100 = arith.mulf %89, %99 : vector<8x64xf32>
    %c0_40 = arith.constant 0 : index
    %c0_41 = arith.constant 0 : index
    %101 = vector.load %arg5[%c0_40, %c0_41] : memref<64x32xf32, #tpu.memory_space<vmem>>, vector<64x32xf32>
    %cst_42 = arith.constant dense<0.000000e+00> : vector<8x32xf32>
    %102 = tpu.matmul %100, %101, %cst_42 {dimension_numbers = #tpu.dot_dimension_numbers<[1], [0], [0], [1], [0, 0, 1, 1], [], []>} : vector<8x64xf32>, vector<64x32xf32>, vector<8x32xf32> -> vector<8x32xf32>
    %103 = arith.addf %60, %102 : vector<8x32xf32>
    %c3_43 = arith.constant 3 : index
    %c0_44 = arith.constant 0 : index
    %104 = vector.load %arg7[%c3_43, %c0_44] : memref<4x96xf32, #tpu.memory_space<vmem>>, vector<1x32xf32>
    %105 = vector.broadcast %104 : vector<1x32xf32> to vector<8x32xf32>
    %106 = arith.addf %103, %105 : vector<8x32xf32>
    %c0_45 = arith.constant 0 : index
    %c0_46 = arith.constant 0 : index
    %c0_47 = arith.constant 0 : index
    %107 = vector.load %arg8[%c0_45, %c0_46, %c0_47] : memref<1x8x32xf32, #tpu.memory_space<vmem>>, vector<1x8x32xf32>
    %108 = vector.shape_cast %107 : vector<1x8x32xf32> to vector<8x32xf32>
    %109 = vector.shape_cast %106 : vector<8x32xf32> to vector<1x8x32xf32>
    tpu.vector_store %arg8[%c0_45, %c0_46, %c0_47], %109 {strides = array<i32>} : memref<1x8x32xf32, #tpu.memory_space<vmem>>, vector<1x8x32xf32>,
    return
  }
  func.func @transform_0(%arg0: i32) -> (i32, i32, i32) {
    %c0_i32 = arith.constant 0 : i32
    %c0_i32_0 = arith.constant 0 : i32
    %c0_i32_1 = arith.constant 0 : i32
    return %arg0, %c0_i32, %c0_i32_0 : i32, i32, i32
  }
  func.func @transform_1(%arg0: i32) -> (i32, i32) {
    %c0_i32 = arith.constant 0 : i32
    %c0_i32_0 = arith.constant 0 : i32
    %c0_i32_1 = arith.constant 0 : i32
    return %c0_i32, %c0_i32_0 : i32, i32
  }
  func.func @transform_2(%arg0: i32) -> (i32, i32) {
    %c0_i32 = arith.constant 0 : i32
    %c0_i32_0 = arith.constant 0 : i32
    %c0_i32_1 = arith.constant 0 : i32
    return %c0_i32, %c0_i32_0 : i32, i32
  }
  func.func @transform_3(%arg0: i32) -> (i32, i32) {
    %c0_i32 = arith.constant 0 : i32
    %c0_i32_0 = arith.constant 0 : i32
    %c0_i32_1 = arith.constant 0 : i32
    return %c0_i32, %c0_i32_0 : i32, i32
  }
  func.func @transform_4(%arg0: i32) -> (i32, i32) {
    %c0_i32 = arith.constant 0 : i32
    %c0_i32_0 = arith.constant 0 : i32
    %c0_i32_1 = arith.constant 0 : i32
    return %c0_i32, %c0_i32_0 : i32, i32
  }
  func.func @transform_5(%arg0: i32) -> (i32, i32) {
    %c0_i32 = arith.constant 0 : i32
    %c0_i32_0 = arith.constant 0 : i32
    %c0_i32_1 = arith.constant 0 : i32
    return %c0_i32, %c0_i32_0 : i32, i32
  }
  func.func @transform_6(%arg0: i32) -> (i32, i32) {
    %c0_i32 = arith.constant 0 : i32
    %c0_i32_0 = arith.constant 0 : i32
    %c0_i32_1 = arith.constant 0 : i32
    return %c0_i32, %c0_i32_0 : i32, i32
  }
  func.func @transform_7(%arg0: i32) -> (i32, i32, i32) {
    %c0_i32 = arith.constant 0 : i32
    %c0_i32_0 = arith.constant 0 : i32
    %c0_i32_1 = arith.constant 0 : i32
    return %arg0, %c0_i32, %c0_i32_0 : i32, i32, i32
  }
}

</mosaic_0001>

<llo_original>
// kernel: siglip_encoder_layer.1
$region0: #{siglip_encoder_layer.1}
  #allocation0 [shape = 'u32[]', space=smem, size = 0x4, offset = 0x4, fixed_abs, tag = 'smem constant byte address 0x4 - core index']
  #allocation1 [shape = 'u32[144,128]{1,0:T(1,128)}', space=vmem, size = 0x12000, scoped, tag = 'internal scratch']
  %s0 = inlined_call_operand.hbm [shape: f32[2,8,32], index: 0, kind: input, shape index: {}]
  %s1 = inlined_call_operand.vmem [shape: f32[32,96], index: 1, kind: input, shape index: {}]
  %s2 = inlined_call_operand.vmem [shape: f32[32,32], index: 2, kind: input, shape index: {}]
  %s3 = inlined_call_operand.vmem [shape: f32[32,64], index: 3, kind: input, shape index: {}]
  %s4 = inlined_call_operand.vmem [shape: f32[64,32], index: 4, kind: input, shape index: {}]
  %s5 = inlined_call_operand.hbm [shape: f32[4,32], index: 5, kind: input, shape index: {}]
  %s6 = inlined_call_operand.hbm [shape: f32[4,96], index: 6, kind: input, shape index: {}]
  %s7 = inlined_call_operand.hbm [shape: f32[2,8,32], index: 7, kind: output, shape index: {}]
  %s8 = sld [smem:[#allocation0]]
  $region73: #{siglip_encoder_layer.1} parent=0
    _
  %s10 = ssub.s32 1, %s8
  %s11 = scalar_select 0, %s10, %s8
  $region1: #{siglip_encoder_layer.1} parent=0
    #allocation2 [shape = 'u8[8192]{0}', space=vmem, size = 0x2000, scoped, tag = 'input window, operand 0']
    #allocation3 [shape = 's32[2]{0}', space=sflag, size = 0x8, scoped, tag = 'scoped memory for siglip_encoder_layer.1']
    #allocation4 [shape = 's32[2]{0}', space=sflag, size = 0x8, scoped, tag = 'scoped memory for siglip_encoder_layer.1']
    #allocation5 [shape = 'u8[2048]{0}', space=vmem, size = 0x800, scoped, tag = 'input window, operand 5, single buffered']
    #allocation6 [shape = 's32[1]{0}', space=sflag, size = 0x4, scoped, tag = 'scoped memory for siglip_encoder_layer.1']
    #allocation7 [shape = 'u8[2048]{0}', space=vmem, size = 0x800, scoped, tag = 'input window, operand 6, single buffered']
    #allocation8 [shape = 'u8[8192]{0}', space=vmem, size = 0x2000, scoped, tag = 'output window, operand 0']
    %12 = vsyncpa [#allocation3], 0
    %s13 = scalar_lea.sflag [#allocation3], 1
    %14 = vsyncpa %s13, 0
    %15 = vsyncpa [#allocation6], 0
    %16 = vsyncpa [#allocation4], 0
    %s17 = scalar_lea.sflag [#allocation4], 1
    %18 = vsyncpa %s17, 0
    loop: start=0, step=1, limit=4
    $region2: #{siglip_encoder_layer.1} parent=1 // loop_pre_header
      _
    $region3: #{siglip_encoder_layer.1} parent=1 // loop_header
      %s20 = sphi 0, %s24
      %p21 = scmp.ge.s32.totalorder %s20, 4
      %s30 = sphi 0, %s32
      %s33 = sphi 0, %s30
      %s34 = sphi 0, %s33
      %s50 = sphi 0, %s34
      %s54 = sphi 0, %s54
      %s56 = sphi 0, %s54
      %s57 = sphi 0, %s56
      %s71 = sphi 0, %s57
      %s75 = sphi 0, %s75
      %s77 = sphi 0, %s75
      %s78 = sphi 0, %s77
      %s92 = sphi 0, %s78
      %s96 = sphi 0, %s96
      %s98 = sphi 0, %s96
      %s99 = sphi 0, %s98
      %s113 = sphi 0, %s99
      %s117 = sphi 0, %s117
      %s119 = sphi 0, %s117
      %s120 = sphi 0, %s119
      %s134 = sphi 0, %s120
      %s138 = sphi 0, %s138
      %s140 = sphi 0, %s138
      %s141 = sphi 0, %s140
      %s155 = sphi 0, %s141
      %s159 = sphi 0, %s159
      %s161 = sphi 0, %s159
      %s162 = sphi 0, %s161
      %s176 = sphi 0, %s162
      %s182 = sphi 0, %s184
      %s185 = sphi 0, %s182
      %s186 = sphi 0, %s185
      %s202 = sphi 0, %s186
    $region4: #{siglip_encoder_layer.1} parent=1 // loop_header_branch
      %23 = sbr.rel (%p21) target = $region8
    $region5: #{siglip_encoder_layer.1} parent=1 // loop_body
      %s25 = ssub.s32 %s20, 1
      %s26 = ssub.s32 %s20, 2
      %s27 = sadd.s32 %s20, 1
      %s28 = ssub.s32 %s20, %s27
      %p29 = scmp.eq.s32.totalorder %s28, 0
      %s31 = sadd.s32 %s30, 1
      %s32 = scalar_select %p29, %s30, %s31
      %p35 = pneg %p29
      %p36 = scmp.eq.s32.totalorder %s20, 1
      %p37 = por %p35, %p36
      %p38 = scmp.ne.s32.totalorder %s30, %s33
      %p39 = scmp.eq.s32.totalorder %s20, 0
      %p40 = por %p38, %p39
      %p41 = scmp.ne.s32.totalorder %s30, %s33
      %p42 = scmp.eq.s32.totalorder %s25, 1
      %p43 = por %p41, %p42
      %p44 = scmp.ne.s32.totalorder %s33, %s34
      %p45 = scmp.eq.s32.totalorder %s25, 0
      %p46 = por %p44, %p45
      %p47 = scmp.ne.s32.totalorder %s33, %s34
      %p48 = scmp.eq.s32.totalorder %s26, 1
      %p49 = por %p47, %p48
      %p51 = scmp.ne.s32.totalorder %s34, %s50
      %p52 = scmp.eq.s32.totalorder %s26, 0
      %p53 = por %p51, %p52
      %s55 = sadd.s32 %s54, 1
      %p58 = scmp.eq.s32.totalorder %s20, 1
      %p59 = scmp.ne.s32.totalorder %s54, %s56
      %p60 = scmp.eq.s32.totalorder %s20, 0
      %p61 = por %p59, %p60
      %p62 = scmp.ne.s32.totalorder %s54, %s56
      %p63 = scmp.eq.s32.totalorder %s25, 1
      %p64 = por %p62, %p63
      %p65 = scmp.ne.s32.totalorder %s56, %s57
      %p66 = scmp.eq.s32.totalorder %s25, 0
      %p67 = por %p65, %p66
      %p68 = scmp.ne.s32.totalorder %s56, %s57
      %p69 = scmp.eq.s32.totalorder %s26, 1
      %p70 = por %p68, %p69
      %p72 = scmp.ne.s32.totalorder %s57, %s71
      %p73 = scmp.eq.s32.totalorder %s26, 0
      %p74 = por %p72, %p73
      %s76 = sadd.s32 %s75, 1
      %p79 = scmp.eq.s32.totalorder %s20, 1
      %p80 = scmp.ne.s32.totalorder %s75, %s77
      %p81 = scmp.eq.s32.totalorder %s20, 0
      %p82 = por %p80, %p81
      %p83 = scmp.ne.s32.totalorder %s75, %s77
      %p84 = scmp.eq.s32.totalorder %s25, 1
      %p85 = por %p83, %p84
      %p86 = scmp.ne.s32.totalorder %s77, %s78
      %p87 = scmp.eq.s32.totalorder %s25, 0
      %p88 = por %p86, %p87
      %p89 = scmp.ne.s32.totalorder %s77, %s78
      %p90 = scmp.eq.s32.totalorder %s26, 1
      %p91 = por %p89, %p90
      %p93 = scmp.ne.s32.totalorder %s78, %s92
      %p94 = scmp.eq.s32.totalorder %s26, 0
      %p95 = por %p93, %p94
      %s97 = sadd.s32 %s96, 1
      %p100 = scmp.eq.s32.totalorder %s20, 1
      %p101 = scmp.ne.s32.totalorder %s96, %s98
      %p102 = scmp.eq.s32.totalorder %s20, 0
      %p103 = por %p101, %p102
      %p104 = scmp.ne.s32.totalorder %s96, %s98
      %p105 = scmp.eq.s32.totalorder %s25, 1
      %p106 = por %p104, %p105
      %p107 = scmp.ne.s32.totalorder %s98, %s99
      %p108 = scmp.eq.s32.totalorder %s25, 0
      %p109 = por %p107, %p108
      %p110 = scmp.ne.s32.totalorder %s98, %s99
      %p111 = scmp.eq.s32.totalorder %s26, 1
      %p112 = por %p110, %p111
      %p114 = scmp.ne.s32.totalorder %s99, %s113
      %p115 = scmp.eq.s32.totalorder %s26, 0
      %p116 = por %p114, %p115
      %s118 = sadd.s32 %s117, 1
      %p121 = scmp.eq.s32.totalorder %s20, 1
      %p122 = scmp.ne.s32.totalorder %s117, %s119
      %p123 = scmp.eq.s32.totalorder %s20, 0
      %p124 = por %p122, %p123
      %p125 = scmp.ne.s32.totalorder %s117, %s119
      %p126 = scmp.eq.s32.totalorder %s25, 1
      %p127 = por %p125, %p126
      %p128 = scmp.ne.s32.totalorder %s119, %s120
      %p129 = scmp.eq.s32.totalorder %s25, 0
      %p130 = por %p128, %p129
      %p131 = scmp.ne.s32.totalorder %s119, %s120
      %p132 = scmp.eq.s32.totalorder %s26, 1
      %p133 = por %p131, %p132
      %p135 = scmp.ne.s32.totalorder %s120, %s134
      %p136 = scmp.eq.s32.totalorder %s26, 0
      %p137 = por %p135, %p136
      %s139 = sadd.s32 %s138, 1
      %p142 = scmp.eq.s32.totalorder %s20, 1
      %p143 = scmp.ne.s32.totalorder %s138, %s140
      %p144 = scmp.eq.s32.totalorder %s20, 0
      %p145 = por %p143, %p144
      %p146 = scmp.ne.s32.totalorder %s138, %s140
      %p147 = scmp.eq.s32.totalorder %s25, 1
      %p148 = por %p146, %p147
      %p149 = scmp.ne.s32.totalorder %s140, %s141
      %p150 = scmp.eq.s32.totalorder %s25, 0
      %p151 = por %p149, %p150
      %p152 = scmp.ne.s32.totalorder %s140, %s141
      %p153 = scmp.eq.s32.totalorder %s26, 1
      %p154 = por %p152, %p153
      %p156 = scmp.ne.s32.totalorder %s141, %s155
      %p157 = scmp.eq.s32.totalorder %s26, 0
      %p158 = por %p156, %p157
      %s160 = sadd.s32 %s159, 1
      %p163 = scmp.eq.s32.totalorder %s20, 1
      %p164 = scmp.ne.s32.totalorder %s159, %s161
      %p165 = scmp.eq.s32.totalorder %s20, 0
      %p166 = por %p164, %p165
      %p167 = scmp.ne.s32.totalorder %s159, %s161
      %p168 = scmp.eq.s32.totalorder %s25, 1
      %p169 = por %p167, %p168
      %p170 = scmp.ne.s32.totalorder %s161, %s162
      %p171 = scmp.eq.s32.totalorder %s25, 0
      %p172 = por %p170, %p171
      %p173 = scmp.ne.s32.totalorder %s161, %s162
      %p174 = scmp.eq.s32.totalorder %s26, 1
      %p175 = por %p173, %p174
      %p177 = scmp.ne.s32.totalorder %s162, %s176
      %p178 = scmp.eq.s32.totalorder %s26, 0
      %p179 = por %p177, %p178
      %s180 = ssub.s32 %s20, %s27
      %p181 = scmp.eq.s32.totalorder %s180, 0
      %s183 = sadd.s32 %s182, 1
      %s184 = scalar_select %p181, %s182, %s183
      %p187 = pneg %p181
      %p188 = scmp.eq.s32.totalorder %s20, 1
      %p189 = por %p187, %p188
      %p190 = scmp.ne.s32.totalorder %s182, %s185
      %p191 = scmp.eq.s32.totalorder %s20, 0
      %p192 = por %p190, %p191
      %p193 = scmp.ne.s32.totalorder %s182, %s185
      %p194 = scmp.eq.s32.totalorder %s25, 1
      %p195 = por %p193, %p194
      %p196 = scmp.ne.s32.totalorder %s185, %s186
      %p197 = scmp.eq.s32.totalorder %s25, 0
      %p198 = por %p196, %p197
      %p199 = scmp.ne.s32.totalorder %s185, %s186
      %p200 = scmp.eq.s32.totalorder %s26, 1
      %p201 = por %p199, %p200
      %p203 = scmp.ne.s32.totalorder %s186, %s202
      %p204 = scmp.eq.s32.totalorder %s26, 0
      %p205 = por %p203, %p204
      %p206 = scmp.le.s32.totalorder 1, %s20
      %p207 = scmp.lt.s32.totalorder %s20, 3
      %p208 = pnand %p206, %p207
      %p209 = pneg %p208
      // Predicated region
      $region9: #{siglip_encoder_layer.1} parent=5 // pred_check
        _
      $region10: #{siglip_encoder_layer.1} parent=5 // pred_check_branch
        %211 = sbr.rel (%p208) target = $region12
      $region11: #{siglip_encoder_layer.1} parent=5 // pred_region
        %s212 = ssub.s32 %s20, 1
        // Predicated region
        $region13: #{siglip_encoder_layer.1} parent=11 // pred_check
          %p213 = pneg %p67
        $region14: #{siglip_encoder_layer.1} parent=11 // pred_check_branch
          %215 = sbr.rel (%p213) target = $region16
        $region15: #{siglip_encoder_layer.1} parent=11 // pred_region
          _
        $region16: #{siglip_encoder_layer.1} parent=11 // pred_fallthru
          _
        // Predicated region
        $region17: #{siglip_encoder_layer.1} parent=11 // pred_check
          %p216 = pneg %p88
        $region18: #{siglip_encoder_layer.1} parent=11 // pred_check_branch
          %218 = sbr.rel (%p216) target = $region20
        $region19: #{siglip_encoder_layer.1} parent=11 // pred_region
          _
        $region20: #{siglip_encoder_layer.1} parent=11 // pred_fallthru
          _
        // Predicated region
        $region21: #{siglip_encoder_layer.1} parent=11 // pred_check
          %p219 = pneg %p109
        $region22: #{siglip_encoder_layer.1} parent=11 // pred_check_branch
          %221 = sbr.rel (%p219) target = $region24
        $region23: #{siglip_encoder_layer.1} parent=11 // pred_region
          _
        $region24: #{siglip_encoder_layer.1} parent=11 // pred_fallthru
          _
        // Predicated region
        $region25: #{siglip_encoder_layer.1} parent=11 // pred_check
          %p222 = pneg %p130
        $region26: #{siglip_encoder_layer.1} parent=11 // pred_check_branch
          %224 = sbr.rel (%p222) target = $region28
        $region27: #{siglip_encoder_layer.1} parent=11 // pred_region
          _
        $region28: #{siglip_encoder_layer.1} parent=11 // pred_fallthru
          _
        // Predicated region
        $region29: #{siglip_encoder_layer.1} parent=11 // pred_check
          %p225 = pneg %p151
        $region30: #{siglip_encoder_layer.1} parent=11 // pred_check_branch
          %227 = sbr.rel (%p225) target = $region32
        $region31: #{siglip_encoder_layer.1} parent=11 // pred_region
          %s229 = ssub.s32 64, 64
          %230 = vsyncadd [#allocation6], %s229
          %s232 = sshll.u32 [#allocation5], 4
          %s233 = int_to_ptr.vmem [resolvable:$true] %s232
          %235 = dma.hbm_to_vmem [thread:$0]  %s5, 64, %s233, [#allocation6]
        $region32: #{siglip_encoder_layer.1} parent=11 // pred_fallthru
          _
        // Predicated region
        $region33: #{siglip_encoder_layer.1} parent=11 // pred_check
          %p236 = pneg %p172
        $region34: #{siglip_encoder_layer.1} parent=11 // pred_check_branch
          %238 = sbr.rel (%p236) target = $region36
        $region35: #{siglip_encoder_layer.1} parent=11 // pred_region
          %s240 = ssub.s32 64, 64
          %241 = vsyncadd [#allocation6], %s240
          %s243 = sshll.u32 [#allocation7], 4
          %s244 = int_to_ptr.vmem [resolvable:$true] %s243
          %246 = dma.hbm_to_vmem [thread:$0]  %s6, 64, %s244, [#allocation6]
        $region36: #{siglip_encoder_layer.1} parent=11 // pred_fallthru
          _
      $region12: #{siglip_encoder_layer.1} parent=5 // pred_fallthru
        _
      %p247 = scmp.lt.s32.totalorder %s20, 2
      // Predicated region
      $region37: #{siglip_encoder_layer.1} parent=5 // pred_check
        %p248 = pneg %p247
      $region38: #{siglip_encoder_layer.1} parent=5 // pred_check_branch
        %250 = sbr.rel (%p248) target = $region40
      $region39: #{siglip_encoder_layer.1} parent=5 // pred_region
        // Predicated region
        $region41: #{siglip_encoder_layer.1} parent=39 // pred_check
          %p251 = pneg %p40
        $region42: #{siglip_encoder_layer.1} parent=39 // pred_check_branch
          %253 = sbr.rel (%p251) target = $region44
        $region43: #{siglip_encoder_layer.1} parent=39 // pred_region
          %s254 = sand.u32 %s30, 1
          %s255 = scalar_lea.sflag [#allocation3], %s254
          %s256 = sand.u32 %s30, 1
          %s257 = smul.addr %s256, 8
          %s258 = scalar_lea.vmem [#allocation2], %s257
          %s260 = ssub.s32 128, 128
          %261 = vsyncadd %s255, %s260
          %s262 = smul.addr %s20, 128
          %s263 = scalar_lea.hbm %s0, %s262
          %s265 = sshll.u32 %s258, 4
          %s266 = int_to_ptr.vmem [resolvable:$true] %s265
          %268 = dma.hbm_to_vmem [thread:$0]  %s263, 128, %s266, %s255
        $region44: #{siglip_encoder_layer.1} parent=39 // pred_fallthru
          _
      $region40: #{siglip_encoder_layer.1} parent=5 // pred_fallthru
        _
      %p269 = scmp.le.s32.totalorder 1, %s20
      %p270 = scmp.lt.s32.totalorder %s20, 3
      %p271 = pnand %p269, %p270
      %p272 = pneg %p271
      // Predicated region
      $region45: #{siglip_encoder_layer.1} parent=5 // pred_check
        _
      $region46: #{siglip_encoder_layer.1} parent=5 // pred_check_branch
        %274 = sbr.rel (%p271) target = $region48
      $region47: #{siglip_encoder_layer.1} parent=5 // pred_region
        %s275 = ssub.s32 %s20, 1
        %s276 = sand.u32 %s33, 1
        %s277 = scalar_lea.sflag [#allocation3], %s276
        %s278 = sand.u32 %s33, 1
        %s279 = smul.addr %s278, 8
        %s280 = scalar_lea.vmem [#allocation2], %s279
        // Predicated region
        $region49: #{siglip_encoder_layer.1} parent=47 // pred_check
          %p281 = pneg %p46
        $region50: #{siglip_encoder_layer.1} parent=47 // pred_check_branch
          %283 = sbr.rel (%p281) target = $region52
        $region51: #{siglip_encoder_layer.1} parent=47 // pred_region
          %284 = dma.done %s277, 128
        $region52: #{siglip_encoder_layer.1} parent=47 // pred_fallthru
          _
        // Predicated region
        $region53: #{siglip_encoder_layer.1} parent=47 // pred_check
          %p285 = pneg %p151
        $region54: #{siglip_encoder_layer.1} parent=47 // pred_check_branch
          %287 = sbr.rel (%p285) target = $region56
        $region55: #{siglip_encoder_layer.1} parent=47 // pred_region
          %288 = dma.done [#allocation6], 64
        $region56: #{siglip_encoder_layer.1} parent=47 // pred_fallthru
          _
        // Predicated region
        $region57: #{siglip_encoder_layer.1} parent=47 // pred_check
          %p289 = pneg %p172
        $region58: #{siglip_encoder_layer.1} parent=47 // pred_check_branch
          %291 = sbr.rel (%p289) target = $region60
        $region59: #{siglip_encoder_layer.1} parent=47 // pred_region
          %292 = dma.done [#allocation6], 64
        $region60: #{siglip_encoder_layer.1} parent=47 // pred_fallthru
          _
        %s293 = sand.u32 %s33, 1
        %s294 = scalar_lea.sflag [#allocation3], %s293
        %s295 = sand.u32 %s33, 1
        %s296 = smul.addr %s295, 8
        %s297 = scalar_lea.vmem [#allocation2], %s296
        %p298 = pneg %p46
        %p299 = pneg %p43
        %p300 = pneg %p67
        %p301 = pneg %p64
        %p302 = pneg %p88
        %p303 = pneg %p85
        %p304 = pneg %p109
        %p305 = pneg %p106
        %p306 = pneg %p130
        %p307 = pneg %p127
        %p308 = pneg %p151
        %p309 = pneg %p148
        %p310 = pneg %p172
        %p311 = pneg %p169
        %p312 = pneg %p198
        %p313 = pneg %p195
        %s314 = sand.u32 %s185, 1
        %s315 = scalar_lea.sflag [#allocation4], %s314
        %s316 = sand.u32 %s185, 1
        %s317 = smul.addr %s316, 8
        %s318 = scalar_lea.vmem [#allocation8], %s317
        %v319 = vld [vmem:[%s280] sm:$0xff]
        %v320 = vld [vmem:[#allocation5] sm:$0x1]
        %v321 = vld [vmem:[#allocation5 + $0x1] sm:$0x1]
        %v322 = vld [vmem:[#allocation5 + $0x2] sm:$0x1]
        %v323 = vld [vmem:[#allocation5 + $0x3] sm:$0x1]
        %vm324 = vcmask 261120
        %v325 = vsel %vm324, %v319, 0.0
        %326 = vadd.xlane.f32.xlu0 %v325
        %v327 = vpop.xlane.xlu0 %326
        %v328 = vrcp.pop 32.0
        %v329 = vmul.f32 %v327, %v328
        %v330 = vsub.f32 %v319, %v329
        %v331 = vmul.f32 %v330, %v330
        %v332 = vsel %vm324, %v331, 0.0
        %333 = vadd.xlane.f32.xlu0 %v332
        %v334 = vpop.xlane.xlu0 %333
        %v335 = vmul.f32 %v334, %v328
        %v336 = vadd.f32 %v335, 1e-06
        %v337 = vrsqrt.pop %v336
        %v338 = vmul.f32 %v330, %v337
        %v339 = vlaneseq
        %v340 = vshrl.u32 %v339, 7
        %v341 = vsub.s32 0, %v340
        %v342 = vrot.slane %v320, %v341
        %v343 = vmul.f32 %v338, %v342
        %v344 = vlaneseq
        %v345 = vshrl.u32 %v344, 7
        %v346 = vsub.s32 0, %v345
        %v347 = vrot.slane %v321, %v346
        %v348 = vadd.f32 %v343, %v347
        %v349 = vld [vmem:[%s1] sm:$0xff]
        %v350 = vld [vmem:[%s1 + $0x8] sm:$0xff]
        %v351 = vld [vmem:[%s1 + $0x10] sm:$0xff]
        %v352 = vld [vmem:[%s1 + $0x18] sm:$0xff]
        %v353 = vld [vmem:[#allocation7] sm:$0x1]
        %v354 = vlaneseq
        %v355 = vshrl.u32 %v354, 7
        %v356 = vsub.s32 0, %v355
        %v357 = vrot.slane %v353, %v356
        %v359 = vsel %vm324, %v348, 0
        %361 = vmatprep.subr.mxu0 0.0
        %362 = vmatpush1.msra.mxu0 0.0
        %363 = vmatprep.subr.mxu0 0.0
        %364 = vmatpush1.msra.mxu0 0.0
        %365 = vmatprep.subr.mxu0 0.0
        %366 = vmatpush1.msra.mxu0 0.0
        %367 = vmatprep.subr.mxu0 0.0
        %368 = vmatpush1.msra.mxu0 0.0
        %369 = vmatprep.subr.mxu0 0.0
        %370 = vmatpush1.msra.mxu0 0.0
        %371 = vmatprep.subr.mxu0 0.0
        %372 = vmatpush1.msra.mxu0 0.0
        %373 = vmatprep.subr.mxu0 0.0
        %374 = vmatpush1.msra.mxu0 0.0
        %375 = vmatprep.subr.mxu0 0.0
        %376 = vmatpush1.msra.mxu0 0.0
        %377 = vmatprep.subr.mxu0 0.0
        %378 = vmatpush1.msra.mxu0 0.0
        %379 = vmatprep.subr.mxu0 0.0
        %380 = vmatpush1.msra.mxu0 0.0
        %381 = vmatprep.subr.mxu0 0.0
        %382 = vmatpush1.msra.mxu0 0.0
        %383 = vmatprep.subr.mxu0 0.0
        %384 = vmatpush1.msra.mxu0 0.0
        %385 = vmatprep.subr.mxu0 0.0
        %386 = vmatpush1.msra.mxu0 %v352
        %387 = vmatprep.subr.mxu0 0.0
        %388 = vmatpush1.msra.mxu0 %v351
        %389 = vmatprep.subr.mxu0 0.0
        %390 = vmatpush1.msra.mxu0 %v350
        %391 = vmatprep.subr.mxu0 0.0
        %392 = vmatpush1.msra.mxu0 %v349
        %393 = vmatprep.subr.mxu0 0.0
        %394 = vmatpush2.msra.mxu0 0.0
        %395 = vmatprep.subr.mxu0 0.0
        %396 = vmatpush2.msra.mxu0 0.0
        %397 = vmatprep.subr.mxu0 0.0
        %398 = vmatpush2.msra.mxu0 0.0
        %399 = vmatprep.subr.mxu0 0.0
        %400 = vmatpush2.msra.mxu0 0.0
        %401 = vmatprep.subr.mxu0 0.0
        %402 = vmatpush2.msra.mxu0 0.0
        %403 = vmatprep.subr.mxu0 0.0
        %404 = vmatpush2.msra.mxu0 0.0
        %405 = vmatprep.subr.mxu0 0.0
        %406 = vmatpush2.msra.mxu0 0.0
        %407 = vmatprep.subr.mxu0 0.0
        %408 = vmatpush2.msra.mxu0 0.0
        %409 = vmatprep.subr.mxu0 0.0
        %410 = vmatpush2.msra.mxu0 0.0
        %411 = vmatprep.subr.mxu0 0.0
        %412 = vmatpush2.msra.mxu0 0.0
        %413 = vmatprep.subr.mxu0 0.0
        %414 = vmatpush2.msra.mxu0 0.0
        %415 = vmatprep.subr.mxu0 0.0
        %416 = vmatpush2.msra.mxu0 0.0
        %417 = vmatprep.subr.mxu0 0.0
        %418 = vmatpush2.msra.mxu0 0.0
        %419 = vmatprep.subr.mxu0 0.0
        %420 = vmatpush2.msra.mxu0 0.0
        %421 = vmatprep.subr.mxu0 0.0
        %422 = vmatpush2.msra.mxu0 0.0
        %423 = vmatprep.subr.mxu0 0.0
        %424 = vmatpush2.msra.mxu0 0.0
        %425 = vmatprep.mubr.f32.mxu0 0.0
        %426 = vmatmul.mubr.f32.gmra.mxu0 %v359
        %v427 = vpop.f32.mrf.mxu0
        %v428 = vadd.f32 %v357, %v427
        %v429 = vpop.f32.mrf.mxu0
        %430 = vdwg.mxu0
        %431 = vxpose.xlu0.b32.start [1/16] %v428, 128
        %432 = vxpose.xlu0.b32.cont [2/16] 0.0, 128
        %433 = vxpose.xlu0.b32.cont [3/16] 0.0, 128
        %434 = vxpose.xlu0.b32.cont [4/16] 0.0, 128
        %435 = vxpose.xlu0.b32.cont [5/16] 0.0, 128
        %436 = vxpose.xlu0.b32.cont [6/16] 0.0, 128
        %437 = vxpose.xlu0.b32.cont [7/16] 0.0, 128
        %438 = vxpose.xlu0.b32.cont [8/16] 0.0, 128
        %439 = vxpose.xlu0.b32.cont [9/16] 0.0, 128
        %440 = vxpose.xlu0.b32.cont [10/16] 0.0, 128
        %441 = vxpose.xlu0.b32.cont [11/16] 0.0, 128
        %442 = vxpose.xlu0.b32.cont [12/16] 0.0, 128
        %443 = vxpose.xlu0.b32.cont [13/16] 0.0, 128
        %444 = vxpose.xlu0.b32.cont [14/16] 0.0, 128
        %445 = vxpose.xlu0.b32.cont [15/16] 0.0, 128
        %446 = vxpose.xlu0.b32.end [16/16] 0.0, 128
        %v447 = vpop.trf.xlu0
        %v448 = vpop.trf.xlu0
        %v449 = vpop.trf.xlu0
        %v450 = vpop.trf.xlu0
        %v451 = vpop.trf.xlu0
        %v452 = vpop.trf.xlu0
        %v453 = vpop.trf.xlu0
        %v454 = vpop.trf.xlu0
        %v455 = vpop.trf.xlu0
        %v456 = vpop.trf.xlu0
        %v457 = vpop.trf.xlu0
        %v458 = vpop.trf.xlu0
        %v459 = vpop.trf.xlu0
        %v460 = vpop.trf.xlu0
        %v461 = vpop.trf.xlu0
        %v462 = vpop.trf.xlu0
        %463 = vxpose.xlu0.b32.start [1/16] %v447, 128
        %464 = vxpose.xlu0.b32.cont [2/16] 0.0, 128
        %465 = vxpose.xlu0.b32.cont [3/16] 0.0, 128
        %466 = vxpose.xlu0.b32.cont [4/16] 0.0, 128
        %467 = vxpose.xlu0.b32.cont [5/16] 0.0, 128
        %468 = vxpose.xlu0.b32.cont [6/16] 0.0, 128
        %469 = vxpose.xlu0.b32.cont [7/16] 0.0, 128
        %470 = vxpose.xlu0.b32.cont [8/16] 0.0, 128
        %471 = vxpose.xlu0.b32.cont [9/16] 0.0, 128
        %472 = vxpose.xlu0.b32.cont [10/16] 0.0, 128
        %473 = vxpose.xlu0.b32.cont [11/16] 0.0, 128
        %474 = vxpose.xlu0.b32.cont [12/16] 0.0, 128
        %475 = vxpose.xlu0.b32.cont [13/16] 0.0, 128
        %476 = vxpose.xlu0.b32.cont [14/16] 0.0, 128
        %477 = vxpose.xlu0.b32.cont [15/16] 0.0, 128
        %478 = vxpose.xlu0.b32.end [16/16] 0.0, 128
        %v479 = vpop.trf.xlu0
        %v480 = vpop.trf.xlu0
        %v481 = vpop.trf.xlu0
        %v482 = vpop.trf.xlu0
        %v483 = vpop.trf.xlu0
        %v484 = vpop.trf.xlu0
        %v485 = vpop.trf.xlu0
        %v486 = vpop.trf.xlu0
        %v487 = vpop.trf.xlu0
        %v488 = vpop.trf.xlu0
        %v489 = vpop.trf.xlu0
        %v490 = vpop.trf.xlu0
        %v491 = vpop.trf.xlu0
        %v492 = vpop.trf.xlu0
        %v493 = vpop.trf.xlu0
        %v494 = vpop.trf.xlu0
        %495 = vxpose.xlu0.b32.start [1/16] %v448, 128
        %496 = vxpose.xlu0.b32.cont [2/16] 0.0, 128
        %497 = vxpose.xlu0.b32.cont [3/16] 0.0, 128
        %498 = vxpose.xlu0.b32.cont [4/16] 0.0, 128
        %499 = vxpose.xlu0.b32.cont [5/16] 0.0, 128
        %500 = vxpose.xlu0.b32.cont [6/16] 0.0, 128
        %501 = vxpose.xlu0.b32.cont [7/16] 0.0, 128
        %502 = vxpose.xlu0.b32.cont [8/16] 0.0, 128
        %503 = vxpose.xlu0.b32.cont [9/16] 0.0, 128
        %504 = vxpose.xlu0.b32.cont [10/16] 0.0, 128
        %505 = vxpose.xlu0.b32.cont [11/16] 0.0, 128
        %506 = vxpose.xlu0.b32.cont [12/16] 0.0, 128
        %507 = vxpose.xlu0.b32.cont [13/16] 0.0, 128
        %508 = vxpose.xlu0.b32.cont [14/16] 0.0, 128
        %509 = vxpose.xlu0.b32.cont [15/16] 0.0, 128
        %510 = vxpose.xlu0.b32.end [16/16] 0.0, 128
        %v511 = vpop.trf.xlu0
        %v512 = vpop.trf.xlu0
        %v513 = vpop.trf.xlu0
        %v514 = vpop.trf.xlu0
        %v515 = vpop.trf.xlu0
        %v516 = vpop.trf.xlu0
        %v517 = vpop.trf.xlu0
        %v518 = vpop.trf.xlu0
        %v519 = vpop.trf.xlu0
        %v520 = vpop.trf.xlu0
        %v521 = vpop.trf.xlu0
        %v522 = vpop.trf.xlu0
        %v523 = vpop.trf.xlu0
        %v524 = vpop.trf.xlu0
        %v525 = vpop.trf.xlu0
        %v526 = vpop.trf.xlu0
        %527 = vxpose.xlu0.b32.start [1/16] %v449, 128
        %528 = vxpose.xlu0.b32.cont [2/16] 0.0, 128
        %529 = vxpose.xlu0.b32.cont [3/16] 0.0, 128
        %530 = vxpose.xlu0.b32.cont [4/16] 0.0, 128
        %531 = vxpose.xlu0.b32.cont [5/16] 0.0, 128
        %532 = vxpose.xlu0.b32.cont [6/16] 0.0, 128
        %533 = vxpose.xlu0.b32.cont [7/16] 0.0, 128
        %534 = vxpose.xlu0.b32.cont [8/16] 0.0, 128
        %535 = vxpose.xlu0.b32.cont [9/16] 0.0, 128
        %536 = vxpose.xlu0.b32.cont [10/16] 0.0, 128
        %537 = vxpose.xlu0.b32.cont [11/16] 0.0, 128
        %538 = vxpose.xlu0.b32.cont [12/16] 0.0, 128
        %539 = vxpose.xlu0.b32.cont [13/16] 0.0, 128
        %540 = vxpose.xlu0.b32.cont [14/16] 0.0, 128
        %541 = vxpose.xlu0.b32.cont [15/16] 0.0, 128
        %542 = vxpose.xlu0.b32.end [16/16] 0.0, 128
        %v543 = vpop.trf.xlu0
        %v544 = vpop.trf.xlu0
        %v545 = vpop.trf.xlu0
        %v546 = vpop.trf.xlu0
        %v547 = vpop.trf.xlu0
        %v548 = vpop.trf.xlu0
        %v549 = vpop.trf.xlu0
        %v550 = vpop.trf.xlu0
        %v551 = vpop.trf.xlu0
        %v552 = vpop.trf.xlu0
        %v553 = vpop.trf.xlu0
        %v554 = vpop.trf.xlu0
        %v555 = vpop.trf.xlu0
        %v556 = vpop.trf.xlu0
        %v557 = vpop.trf.xlu0
        %v558 = vpop.trf.xlu0
        %559 = vxpose.xlu0.b32.start [1/16] %v450, 128
        %560 = vxpose.xlu0.b32.cont [2/16] 0.0, 128
        %561 = vxpose.xlu0.b32.cont [3/16] 0.0, 128
        %562 = vxpose.xlu0.b32.cont [4/16] 0.0, 128
        %563 = vxpose.xlu0.b32.cont [5/16] 0.0, 128
        %564 = vxpose.xlu0.b32.cont [6/16] 0.0, 128
        %565 = vxpose.xlu0.b32.cont [7/16] 0.0, 128
        %566 = vxpose.xlu0.b32.cont [8/16] 0.0, 128
        %567 = vxpose.xlu0.b32.cont [9/16] 0.0, 128
        %568 = vxpose.xlu0.b32.cont [10/16] 0.0, 128
        %569 = vxpose.xlu0.b32.cont [11/16] 0.0, 128
        %570 = vxpose.xlu0.b32.cont [12/16] 0.0, 128
        %571 = vxpose.xlu0.b32.cont [13/16] 0.0, 128
        %572 = vxpose.xlu0.b32.cont [14/16] 0.0, 128
        %573 = vxpose.xlu0.b32.cont [15/16] 0.0, 128
        %574 = vxpose.xlu0.b32.end [16/16] 0.0, 128
        %v575 = vpop.trf.xlu0
        %v576 = vpop.trf.xlu0
        %v577 = vpop.trf.xlu0
        %v578 = vpop.trf.xlu0
        %v579 = vpop.trf.xlu0
        %v580 = vpop.trf.xlu0
        %v581 = vpop.trf.xlu0
        %v582 = vpop.trf.xlu0
        %v583 = vpop.trf.xlu0
        %v584 = vpop.trf.xlu0
        %v585 = vpop.trf.xlu0
        %v586 = vpop.trf.xlu0
        %v587 = vpop.trf.xlu0
        %v588 = vpop.trf.xlu0
        %v589 = vpop.trf.xlu0
        %v590 = vpop.trf.xlu0
        %591 = vxpose.xlu0.b32.start [1/16] %v451, 128
        %592 = vxpose.xlu0.b32.cont [2/16] 0.0, 128
        %593 = vxpose.xlu0.b32.cont [3/16] 0.0, 128
        %594 = vxpose.xlu0.b32.cont [4/16] 0.0, 128
        %595 = vxpose.xlu0.b32.cont [5/16] 0.0, 128
        %596 = vxpose.xlu0.b32.cont [6/16] 0.0, 128
        %597 = vxpose.xlu0.b32.cont [7/16] 0.0, 128
        %598 = vxpose.xlu0.b32.cont [8/16] 0.0, 128
        %599 = vxpose.xlu0.b32.cont [9/16] 0.0, 128
        %600 = vxpose.xlu0.b32.cont [10/16] 0.0, 128
        %601 = vxpose.xlu0.b32.cont [11/16] 0.0, 128
        %602 = vxpose.xlu0.b32.cont [12/16] 0.0, 128
        %603 = vxpose.xlu0.b32.cont [13/16] 0.0, 128
        %604 = vxpose.xlu0.b32.cont [14/16] 0.0, 128
        %605 = vxpose.xlu0.b32.cont [15/16] 0.0, 128
        %606 = vxpose.xlu0.b32.end [16/16] 0.0, 128
        %v607 = vpop.trf.xlu0
        %v608 = vpop.trf.xlu0
        %v609 = vpop.trf.xlu0
        %v610 = vpop.trf.xlu0
        %v611 = vpop.trf.xlu0
        %v612 = vpop.trf.xlu0
        %v613 = vpop.trf.xlu0
        %v614 = vpop.trf.xlu0
        %v615 = vpop.trf.xlu0
        %v616 = vpop.trf.xlu0
        %v617 = vpop.trf.xlu0
        %v618 = vpop.trf.xlu0
        %v619 = vpop.trf.xlu0
        %v620 = vpop.trf.xlu0
        %v621 = vpop.trf.xlu0
        %v622 = vpop.trf.xlu0
        %623 = vxpose.xlu0.b32.start [1/16] %v452, 128
        %624 = vxpose.xlu0.b32.cont [2/16] 0.0, 128
        %625 = vxpose.xlu0.b32.cont [3/16] 0.0, 128
        %626 = vxpose.xlu0.b32.cont [4/16] 0.0, 128
        %627 = vxpose.xlu0.b32.cont [5/16] 0.0, 128
        %628 = vxpose.xlu0.b32.cont [6/16] 0.0, 128
        %629 = vxpose.xlu0.b32.cont [7/16] 0.0, 128
        %630 = vxpose.xlu0.b32.cont [8/16] 0.0, 128
        %631 = vxpose.xlu0.b32.cont [9/16] 0.0, 128
        %632 = vxpose.xlu0.b32.cont [10/16] 0.0, 128
        %633 = vxpose.xlu0.b32.cont [11/16] 0.0, 128
        %634 = vxpose.xlu0.b32.cont [12/16] 0.0, 128
        %635 = vxpose.xlu0.b32.cont [13/16] 0.0, 128
        %636 = vxpose.xlu0.b32.cont [14/16] 0.0, 128
        %637 = vxpose.xlu0.b32.cont [15/16] 0.0, 128
        %638 = vxpose.xlu0.b32.end [16/16] 0.0, 128
        %v639 = vpop.trf.xlu0
        %v640 = vpop.trf.xlu0
        %v641 = vpop.trf.xlu0
        %v642 = vpop.trf.xlu0
        %v643 = vpop.trf.xlu0
        %v644 = vpop.trf.xlu0
        %v645 = vpop.trf.xlu0
        %v646 = vpop.trf.xlu0
        %v647 = vpop.trf.xlu0
        %v648 = vpop.trf.xlu0
        %v649 = vpop.trf.xlu0
        %v650 = vpop.trf.xlu0
        %v651 = vpop.trf.xlu0
        %v652 = vpop.trf.xlu0
        %v653 = vpop.trf.xlu0
        %v654 = vpop.trf.xlu0
        %655 = vxpose.xlu0.b32.start [1/16] %v453, 128
        %656 = vxpose.xlu0.b32.cont [2/16] 0.0, 128
        %657 = vxpose.xlu0.b32.cont [3/16] 0.0, 128
        %658 = vxpose.xlu0.b32.cont [4/16] 0.0, 128
        %659 = vxpose.xlu0.b32.cont [5/16] 0.0, 128
        %660 = vxpose.xlu0.b32.cont [6/16] 0.0, 128
        %661 = vxpose.xlu0.b32.cont [7/16] 0.0, 128
        %662 = vxpose.xlu0.b32.cont [8/16] 0.0, 128
        %663 = vxpose.xlu0.b32.cont [9/16] 0.0, 128
        %664 = vxpose.xlu0.b32.cont [10/16] 0.0, 128
        %665 = vxpose.xlu0.b32.cont [11/16] 0.0, 128
        %666 = vxpose.xlu0.b32.cont [12/16] 0.0, 128
        %667 = vxpose.xlu0.b32.cont [13/16] 0.0, 128
        %668 = vxpose.xlu0.b32.cont [14/16] 0.0, 128
        %669 = vxpose.xlu0.b32.cont [15/16] 0.0, 128
        %670 = vxpose.xlu0.b32.end [16/16] 0.0, 128
        %v671 = vpop.trf.xlu0
        %v672 = vpop.trf.xlu0
        %v673 = vpop.trf.xlu0
        %v674 = vpop.trf.xlu0
        %v675 = vpop.trf.xlu0
        %v676 = vpop.trf.xlu0
        %v677 = vpop.trf.xlu0
        %v678 = vpop.trf.xlu0
        %v679 = vpop.trf.xlu0
        %v680 = vpop.trf.xlu0
        %v681 = vpop.trf.xlu0
        %v682 = vpop.trf.xlu0
        %v683 = vpop.trf.xlu0
        %v684 = vpop.trf.xlu0
        %v685 = vpop.trf.xlu0
        %v686 = vpop.trf.xlu0
        %687 = vxpose.xlu0.b32.start [1/16] %v454, 128
        %688 = vxpose.xlu0.b32.cont [2/16] 0.0, 128
        %689 = vxpose.xlu0.b32.cont [3/16] 0.0, 128
        %690 = vxpose.xlu0.b32.cont [4/16] 0.0, 128
        %691 = vxpose.xlu0.b32.cont [5/16] 0.0, 128
        %692 = vxpose.xlu0.b32.cont [6/16] 0.0, 128
        %693 = vxpose.xlu0.b32.cont [7/16] 0.0, 128
        %694 = vxpose.xlu0.b32.cont [8/16] 0.0, 128
        %695 = vxpose.xlu0.b32.cont [9/16] 0.0, 128
        %696 = vxpose.xlu0.b32.cont [10/16] 0.0, 128
        %697 = vxpose.xlu0.b32.cont [11/16] 0.0, 128
        %698 = vxpose.xlu0.b32.cont [12/16] 0.0, 128
        %699 = vxpose.xlu0.b32.cont [13/16] 0.0, 128
        %700 = vxpose.xlu0.b32.cont [14/16] 0.0, 128
        %701 = vxpose.xlu0.b32.cont [15/16] 0.0, 128
        %702 = vxpose.xlu0.b32.end [16/16] 0.0, 128
        %v703 = vpop.trf.xlu0
        %v704 = vpop.trf.xlu0
        %v705 = vpop.trf.xlu0
        %v706 = vpop.trf.xlu0
        %v707 = vpop.trf.xlu0
        %v708 = vpop.trf.xlu0
        %v709 = vpop.trf.xlu0
        %v710 = vpop.trf.xlu0
        %v711 = vpop.trf.xlu0
        %v712 = vpop.trf.xlu0
        %v713 = vpop.trf.xlu0
        %v714 = vpop.trf.xlu0
        %v715 = vpop.trf.xlu0
        %v716 = vpop.trf.xlu0
        %v717 = vpop.trf.xlu0
        %v718 = vpop.trf.xlu0
        %719 = vxpose.xlu0.b32.start [1/16] %v455, 128
        %720 = vxpose.xlu0.b32.cont [2/16] 0.0, 128
        %721 = vxpose.xlu0.b32.cont [3/16] 0.0, 128
        %722 = vxpose.xlu0.b32.cont [4/16] 0.0, 128
        %723 = vxpose.xlu0.b32.cont [5/16] 0.0, 128
        %724 = vxpose.xlu0.b32.cont [6/16] 0.0, 128
        %725 = vxpose.xlu0.b32.cont [7/16] 0.0, 128
        %726 = vxpose.xlu0.b32.cont [8/16] 0.0, 128
        %727 = vxpose.xlu0.b32.cont [9/16] 0.0, 128
        %728 = vxpose.xlu0.b32.cont [10/16] 0.0, 128
        %729 = vxpose.xlu0.b32.cont [11/16] 0.0, 128
        %730 = vxpose.xlu0.b32.cont [12/16] 0.0, 128
        %731 = vxpose.xlu0.b32.cont [13/16] 0.0, 128
        %732 = vxpose.xlu0.b32.cont [14/16] 0.0, 128
        %733 = vxpose.xlu0.b32.cont [15/16] 0.0, 128
        %734 = vxpose.xlu0.b32.end [16/16] 0.0, 128
        %v735 = vpop.trf.xlu0
        %v736 = vpop.trf.xlu0
        %v737 = vpop.trf.xlu0
        %v738 = vpop.trf.xlu0
        %v739 = vpop.trf.xlu0
        %v740 = vpop.trf.xlu0
        %v741 = vpop.trf.xlu0
        %v742 = vpop.trf.xlu0
        %v743 = vpop.trf.xlu0
        %v744 = vpop.trf.xlu0
        %v745 = vpop.trf.xlu0
        %v746 = vpop.trf.xlu0
        %v747 = vpop.trf.xlu0
        %v748 = vpop.trf.xlu0
        %v749 = vpop.trf.xlu0
        %v750 = vpop.trf.xlu0
        %751 = vxpose.xlu0.b32.start [1/16] %v456, 128
        %752 = vxpose.xlu0.b32.cont [2/16] 0.0, 128
        %753 = vxpose.xlu0.b32.cont [3/16] 0.0, 128
        %754 = vxpose.xlu0.b32.cont [4/16] 0.0, 128
        %755 = vxpose.xlu0.b32.cont [5/16] 0.0, 128
        %756 = vxpose.xlu0.b32.cont [6/16] 0.0, 128
        %757 = vxpose.xlu0.b32.cont [7/16] 0.0, 128
        %758 = vxpose.xlu0.b32.cont [8/16] 0.0, 128
        %759 = vxpose.xlu0.b32.cont [9/16] 0.0, 128
        %760 = vxpose.xlu0.b32.cont [10/16] 0.0, 128
        %761 = vxpose.xlu0.b32.cont [11/16] 0.0, 128
        %762 = vxpose.xlu0.b32.cont [12/16] 0.0, 128
        %763 = vxpose.xlu0.b32.cont [13/16] 0.0, 128
        %764 = vxpose.xlu0.b32.cont [14/16] 0.0, 128
        %765 = vxpose.xlu0.b32.cont [15/16] 0.0, 128
        %766 = vxpose.xlu0.b32.end [16/16] 0.0, 128
        %v767 = vpop.trf.xlu0
        %v768 = vpop.trf.xlu0
        %v769 = vpop.trf.xlu0
        %v770 = vpop.trf.xlu0
        %v771 = vpop.trf.xlu0
        %v772 = vpop.trf.xlu0
        %v773 = vpop.trf.xlu0
        %v774 = vpop.trf.xlu0
        %v775 = vpop.trf.xlu0
        %v776 = vpop.trf.xlu0
        %v777 = vpop.trf.xlu0
        %v778 = vpop.trf.xlu0
        %v779 = vpop.trf.xlu0
        %v780 = vpop.trf.xlu0
        %v781 = vpop.trf.xlu0
        %v782 = vpop.trf.xlu0
        %783 = vxpose.xlu0.b32.start [1/16] %v457, 128
        %784 = vxpose.xlu0.b32.cont [2/16] 0.0, 128
        %785 = vxpose.xlu0.b32.cont [3/16] 0.0, 128
        %786 = vxpose.xlu0.b32.cont [4/16] 0.0, 128
        %787 = vxpose.xlu0.b32.cont [5/16] 0.0, 128
        %788 = vxpose.xlu0.b32.cont [6/16] 0.0, 128
        %789 = vxpose.xlu0.b32.cont [7/16] 0.0, 128
        %790 = vxpose.xlu0.b32.cont [8/16] 0.0, 128
        %791 = vxpose.xlu0.b32.cont [9/16] 0.0, 128
        %792 = vxpose.xlu0.b32.cont [10/16] 0.0, 128
        %793 = vxpose.xlu0.b32.cont [11/16] 0.0, 128
        %794 = vxpose.xlu0.b32.cont [12/16] 0.0, 128
        %795 = vxpose.xlu0.b32.cont [13/16] 0.0, 128
        %796 = vxpose.xlu0.b32.cont [14/16] 0.0, 128
        %797 = vxpose.xlu0.b32.cont [15/16] 0.0, 128
        %798 = vxpose.xlu0.b32.end [16/16] 0.0, 128
        %v799 = vpop.trf.xlu0
        %v800 = vpop.trf.xlu0
        %v801 = vpop.trf.xlu0
        %v802 = vpop.trf.xlu0
        %v803 = vpop.trf.xlu0
        %v804 = vpop.trf.xlu0
        %v805 = vpop.trf.xlu0
        %v806 = vpop.trf.xlu0
        %v807 = vpop.trf.xlu0
        %v808 = vpop.trf.xlu0
        %v809 = vpop.trf.xlu0
        %v810 = vpop.trf.xlu0
        %v811 = vpop.trf.xlu0
        %v812 = vpop.trf.xlu0
        %v813 = vpop.trf.xlu0
        %v814 = vpop.trf.xlu0
        %815 = vxpose.xlu0.b32.start [1/16] %v458, 128
        %816 = vxpose.xlu0.b32.cont [2/16] 0.0, 128
        %817 = vxpose.xlu0.b32.cont [3/16] 0.0, 128
        %818 = vxpose.xlu0.b32.cont [4/16] 0.0, 128
        %819 = vxpose.xlu0.b32.cont [5/16] 0.0, 128
        %820 = vxpose.xlu0.b32.cont [6/16] 0.0, 128
        %821 = vxpose.xlu0.b32.cont [7/16] 0.0, 128
        %822 = vxpose.xlu0.b32.cont [8/16] 0.0, 128
        %823 = vxpose.xlu0.b32.cont [9/16] 0.0, 128
        %824 = vxpose.xlu0.b32.cont [10/16] 0.0, 128
        %825 = vxpose.xlu0.b32.cont [11/16] 0.0, 128
        %826 = vxpose.xlu0.b32.cont [12/16] 0.0, 128
        %827 = vxpose.xlu0.b32.cont [13/16] 0.0, 128
        %828 = vxpose.xlu0.b32.cont [14/16] 0.0, 128
        %829 = vxpose.xlu0.b32.cont [15/16] 0.0, 128
        %830 = vxpose.xlu0.b32.end [16/16] 0.0, 128
        %v831 = vpop.trf.xlu0
        %v832 = vpop.trf.xlu0
        %v833 = vpop.trf.xlu0
        %v834 = vpop.trf.xlu0
        %v835 = vpop.trf.xlu0
        %v836 = vpop.trf.xlu0
        %v837 = vpop.trf.xlu0
        %v838 = vpop.trf.xlu0
        %v839 = vpop.trf.xlu0
        %v840 = vpop.trf.xlu0
        %v841 = vpop.trf.xlu0
        %v842 = vpop.trf.xlu0
        %v843 = vpop.trf.xlu0
        %v844 = vpop.trf.xlu0
        %v845 = vpop.trf.xlu0
        %v846 = vpop.trf.xlu0
        %vm847 = vcmask 64512
        %v849 = vsel %vm847, %v479, 0
        %v852 = vsel %vm847, %v607, 0
        %854 = vmatprep.subr.mxu0 0.0
        %855 = vmatpush1.xpose.msra.mxu0 0.0
        %856 = vmatprep.subr.mxu0 0.0
        %857 = vmatpush1.xpose.msra.mxu0 0.0
        %858 = vmatprep.subr.mxu0 0.0
        %859 = vmatpush1.xpose.msra.mxu0 0.0
        %860 = vmatprep.subr.mxu0 0.0
        %861 = vmatpush1.xpose.msra.mxu0 0.0
        %862 = vmatprep.subr.mxu0 0.0
        %863 = vmatpush1.xpose.msra.mxu0 0.0
        %864 = vmatprep.subr.mxu0 0.0
        %865 = vmatpush1.xpose.msra.mxu0 0.0
        %866 = vmatprep.subr.mxu0 0.0
        %867 = vmatpush1.xpose.msra.mxu0 0.0
        %868 = vmatprep.subr.mxu0 0.0
        %869 = vmatpush1.xpose.msra.mxu0 0.0
        %870 = vmatprep.subr.mxu0 0.0
        %871 = vmatpush1.xpose.msra.mxu0 0.0
        %872 = vmatprep.subr.mxu0 0.0
        %873 = vmatpush1.xpose.msra.mxu0 0.0
        %874 = vmatprep.subr.mxu0 0.0
        %875 = vmatpush1.xpose.msra.mxu0 0.0
        %876 = vmatprep.subr.mxu0 0.0
        %877 = vmatpush1.xpose.msra.mxu0 0.0
        %878 = vmatprep.subr.mxu0 0.0
        %879 = vmatpush1.xpose.msra.mxu0 0.0
        %880 = vmatprep.subr.mxu0 0.0
        %881 = vmatpush1.xpose.msra.mxu0 0.0
        %882 = vmatprep.subr.mxu0 0.0
        %883 = vmatpush1.xpose.msra.mxu0 0.0
        %884 = vmatprep.subr.mxu0 0.0
        %885 = vmatpush1.xpose.msra.mxu0 %v852
        %886 = vmatprep.subr.mxu0 0.0
        %887 = vmatpush2.xpose.msra.mxu0 0.0
        %888 = vmatprep.subr.mxu0 0.0
        %889 = vmatpush2.xpose.msra.mxu0 0.0
        %890 = vmatprep.subr.mxu0 0.0
        %891 = vmatpush2.xpose.msra.mxu0 0.0
        %892 = vmatprep.subr.mxu0 0.0
        %893 = vmatpush2.xpose.msra.mxu0 0.0
        %894 = vmatprep.subr.mxu0 0.0
        %895 = vmatpush2.xpose.msra.mxu0 0.0
        %896 = vmatprep.subr.mxu0 0.0
        %897 = vmatpush2.xpose.msra.mxu0 0.0
        %898 = vmatprep.subr.mxu0 0.0
        %899 = vmatpush2.xpose.msra.mxu0 0.0
        %900 = vmatprep.subr.mxu0 0.0
        %901 = vmatpush2.xpose.msra.mxu0 0.0
        %902 = vmatprep.subr.mxu0 0.0
        %903 = vmatpush2.xpose.msra.mxu0 0.0
        %904 = vmatprep.subr.mxu0 0.0
        %905 = vmatpush2.xpose.msra.mxu0 0.0
        %906 = vmatprep.subr.mxu0 0.0
        %907 = vmatpush2.xpose.msra.mxu0 0.0
        %908 = vmatprep.subr.mxu0 0.0
        %909 = vmatpush2.xpose.msra.mxu0 0.0
        %910 = vmatprep.subr.mxu0 0.0
        %911 = vmatpush2.xpose.msra.mxu0 0.0
        %912 = vmatprep.subr.mxu0 0.0
        %913 = vmatpush2.xpose.msra.mxu0 0.0
        %914 = vmatprep.subr.mxu0 0.0
        %915 = vmatpush2.xpose.msra.mxu0 0.0
        %916 = vmatprep.subr.mxu0 0.0
        %917 = vmatpush2.xpose.msra.mxu0 0.0
        %918 = vmatprep.mubr.f32.mxu0 0.0
        %919 = vmatmul.mubr.f32.gmra.mxu0 %v849
        %v920 = vpop.f32.mrf.mxu0
        %v921 = vadd.f32 0.0, %v920
        %v922 = vpop.f32.mrf.mxu0
        %923 = vdwg.mxu0
        %v925 = vsel %vm847, %v511, 0
        %v928 = vsel %vm847, %v639, 0
        %930 = vmatprep.subr.mxu0 0.0
        %931 = vmatpush1.xpose.msra.mxu0 0.0
        %932 = vmatprep.subr.mxu0 0.0
        %933 = vmatpush1.xpose.msra.mxu0 0.0
        %934 = vmatprep.subr.mxu0 0.0
        %935 = vmatpush1.xpose.msra.mxu0 0.0
        %936 = vmatprep.subr.mxu0 0.0
        %937 = vmatpush1.xpose.msra.mxu0 0.0
        %938 = vmatprep.subr.mxu0 0.0
        %939 = vmatpush1.xpose.msra.mxu0 0.0
        %940 = vmatprep.subr.mxu0 0.0
        %941 = vmatpush1.xpose.msra.mxu0 0.0
        %942 = vmatprep.subr.mxu0 0.0
        %943 = vmatpush1.xpose.msra.mxu0 0.0
        %944 = vmatprep.subr.mxu0 0.0
        %945 = vmatpush1.xpose.msra.mxu0 0.0
        %946 = vmatprep.subr.mxu0 0.0
        %947 = vmatpush1.xpose.msra.mxu0 0.0
        %948 = vmatprep.subr.mxu0 0.0
        %949 = vmatpush1.xpose.msra.mxu0 0.0
        %950 = vmatprep.subr.mxu0 0.0
        %951 = vmatpush1.xpose.msra.mxu0 0.0
        %952 = vmatprep.subr.mxu0 0.0
        %953 = vmatpush1.xpose.msra.mxu0 0.0
        %954 = vmatprep.subr.mxu0 0.0
        %955 = vmatpush1.xpose.msra.mxu0 0.0
        %956 = vmatprep.subr.mxu0 0.0
        %957 = vmatpush1.xpose.msra.mxu0 0.0
        %958 = vmatprep.subr.mxu0 0.0
        %959 = vmatpush1.xpose.msra.mxu0 0.0
        %960 = vmatprep.subr.mxu0 0.0
        %961 = vmatpush1.xpose.msra.mxu0 %v928
        %962 = vmatprep.subr.mxu0 0.0
        %963 = vmatpush2.xpose.msra.mxu0 0.0
        %964 = vmatprep.subr.mxu0 0.0
        %965 = vmatpush2.xpose.msra.mxu0 0.0
        %966 = vmatprep.subr.mxu0 0.0
        %967 = vmatpush2.xpose.msra.mxu0 0.0
        %968 = vmatprep.subr.mxu0 0.0
        %969 = vmatpush2.xpose.msra.mxu0 0.0
        %970 = vmatprep.subr.mxu0 0.0
        %971 = vmatpush2.xpose.msra.mxu0 0.0
        %972 = vmatprep.subr.mxu0 0.0
        %973 = vmatpush2.xpose.msra.mxu0 0.0
        %974 = vmatprep.subr.mxu0 0.0
        %975 = vmatpush2.xpose.msra.mxu0 0.0
        %976 = vmatprep.subr.mxu0 0.0
        %977 = vmatpush2.xpose.msra.mxu0 0.0
        %978 = vmatprep.subr.mxu0 0.0
        %979 = vmatpush2.xpose.msra.mxu0 0.0
        %980 = vmatprep.subr.mxu0 0.0
        %981 = vmatpush2.xpose.msra.mxu0 0.0
        %982 = vmatprep.subr.mxu0 0.0
        %983 = vmatpush2.xpose.msra.mxu0 0.0
        %984 = vmatprep.subr.mxu0 0.0
        %985 = vmatpush2.xpose.msra.mxu0 0.0
        %986 = vmatprep.subr.mxu0 0.0
        %987 = vmatpush2.xpose.msra.mxu0 0.0
        %988 = vmatprep.subr.mxu0 0.0
        %989 = vmatpush2.xpose.msra.mxu0 0.0
        %990 = vmatprep.subr.mxu0 0.0
        %991 = vmatpush2.xpose.msra.mxu0 0.0
        %992 = vmatprep.subr.mxu0 0.0
        %993 = vmatpush2.xpose.msra.mxu0 0.0
        %994 = vmatprep.mubr.f32.mxu0 0.0
        %995 = vmatmul.mubr.f32.gmra.mxu0 %v925
        %v996 = vpop.f32.mrf.mxu0
        %v997 = vadd.f32 0.0, %v996
        %v998 = vpop.f32.mrf.mxu0
        %999 = vdwg.mxu0
        %v1001 = vsel %vm847, %v543, 0
        %v1004 = vsel %vm847, %v671, 0
        %1006 = vmatprep.subr.mxu0 0.0
        %1007 = vmatpush1.xpose.msra.mxu0 0.0
        %1008 = vmatprep.subr.mxu0 0.0
        %1009 = vmatpush1.xpose.msra.mxu0 0.0
        %1010 = vmatprep.subr.mxu0 0.0
        %1011 = vmatpush1.xpose.msra.mxu0 0.0
        %1012 = vmatprep.subr.mxu0 0.0
        %1013 = vmatpush1.xpose.msra.mxu0 0.0
        %1014 = vmatprep.subr.mxu0 0.0
        %1015 = vmatpush1.xpose.msra.mxu0 0.0
        %1016 = vmatprep.subr.mxu0 0.0
        %1017 = vmatpush1.xpose.msra.mxu0 0.0
        %1018 = vmatprep.subr.mxu0 0.0
        %1019 = vmatpush1.xpose.msra.mxu0 0.0
        %1020 = vmatprep.subr.mxu0 0.0
        %1021 = vmatpush1.xpose.msra.mxu0 0.0
        %1022 = vmatprep.subr.mxu0 0.0
        %1023 = vmatpush1.xpose.msra.mxu0 0.0
        %1024 = vmatprep.subr.mxu0 0.0
        %1025 = vmatpush1.xpose.msra.mxu0 0.0
        %1026 = vmatprep.subr.mxu0 0.0
        %1027 = vmatpush1.xpose.msra.mxu0 0.0
        %1028 = vmatprep.subr.mxu0 0.0
        %1029 = vmatpush1.xpose.msra.mxu0 0.0
        %1030 = vmatprep.subr.mxu0 0.0
        %1031 = vmatpush1.xpose.msra.mxu0 0.0
        %1032 = vmatprep.subr.mxu0 0.0
        %1033 = vmatpush1.xpose.msra.mxu0 0.0
        %1034 = vmatprep.subr.mxu0 0.0
        %1035 = vmatpush1.xpose.msra.mxu0 0.0
        %1036 = vmatprep.subr.mxu0 0.0
        %1037 = vmatpush1.xpose.msra.mxu0 %v1004
        %1038 = vmatprep.subr.mxu0 0.0
        %1039 = vmatpush2.xpose.msra.mxu0 0.0
        %1040 = vmatprep.subr.mxu0 0.0
        %1041 = vmatpush2.xpose.msra.mxu0 0.0
        %1042 = vmatprep.subr.mxu0 0.0
        %1043 = vmatpush2.xpose.msra.mxu0 0.0
        %1044 = vmatprep.subr.mxu0 0.0
        %1045 = vmatpush2.xpose.msra.mxu0 0.0
        %1046 = vmatprep.subr.mxu0 0.0
        %1047 = vmatpush2.xpose.msra.mxu0 0.0
        %1048 = vmatprep.subr.mxu0 0.0
        %1049 = vmatpush2.xpose.msra.mxu0 0.0
        %1050 = vmatprep.subr.mxu0 0.0
        %1051 = vmatpush2.xpose.msra.mxu0 0.0
        %1052 = vmatprep.subr.mxu0 0.0
        %1053 = vmatpush2.xpose.msra.mxu0 0.0
        %1054 = vmatprep.subr.mxu0 0.0
        %1055 = vmatpush2.xpose.msra.mxu0 0.0
        %1056 = vmatprep.subr.mxu0 0.0
        %1057 = vmatpush2.xpose.msra.mxu0 0.0
        %1058 = vmatprep.subr.mxu0 0.0
        %1059 = vmatpush2.xpose.msra.mxu0 0.0
        %1060 = vmatprep.subr.mxu0 0.0
        %1061 = vmatpush2.xpose.msra.mxu0 0.0
        %1062 = vmatprep.subr.mxu0 0.0
        %1063 = vmatpush2.xpose.msra.mxu0 0.0
        %1064 = vmatprep.subr.mxu0 0.0
        %1065 = vmatpush2.xpose.msra.mxu0 0.0
        %1066 = vmatprep.subr.mxu0 0.0
        %1067 = vmatpush2.xpose.msra.mxu0 0.0
        %1068 = vmatprep.subr.mxu0 0.0
        %1069 = vmatpush2.xpose.msra.mxu0 0.0
        %1070 = vmatprep.mubr.f32.mxu0 0.0
        %1071 = vmatmul.mubr.f32.gmra.mxu0 %v1001
        %v1072 = vpop.f32.mrf.mxu0
        %v1073 = vadd.f32 0.0, %v1072
        %v1074 = vpop.f32.mrf.mxu0
        %1075 = vdwg.mxu0
        %v1077 = vsel %vm847, %v575, 0
        %v1080 = vsel %vm847, %v703, 0
        %1082 = vmatprep.subr.mxu0 0.0
        %1083 = vmatpush1.xpose.msra.mxu0 0.0
        %1084 = vmatprep.subr.mxu0 0.0
        %1085 = vmatpush1.xpose.msra.mxu0 0.0
        %1086 = vmatprep.subr.mxu0 0.0
        %1087 = vmatpush1.xpose.msra.mxu0 0.0
        %1088 = vmatprep.subr.mxu0 0.0
        %1089 = vmatpush1.xpose.msra.mxu0 0.0
        %1090 = vmatprep.subr.mxu0 0.0
        %1091 = vmatpush1.xpose.msra.mxu0 0.0
        %1092 = vmatprep.subr.mxu0 0.0
        %1093 = vmatpush1.xpose.msra.mxu0 0.0
        %1094 = vmatprep.subr.mxu0 0.0
        %1095 = vmatpush1.xpose.msra.mxu0 0.0
        %1096 = vmatprep.subr.mxu0 0.0
        %1097 = vmatpush1.xpose.msra.mxu0 0.0
        %1098 = vmatprep.subr.mxu0 0.0
        %1099 = vmatpush1.xpose.msra.mxu0 0.0
        %1100 = vmatprep.subr.mxu0 0.0
        %1101 = vmatpush1.xpose.msra.mxu0 0.0
        %1102 = vmatprep.subr.mxu0 0.0
        %1103 = vmatpush1.xpose.msra.mxu0 0.0
        %1104 = vmatprep.subr.mxu0 0.0
        %1105 = vmatpush1.xpose.msra.mxu0 0.0
        %1106 = vmatprep.subr.mxu0 0.0
        %1107 = vmatpush1.xpose.msra.mxu0 0.0
        %1108 = vmatprep.subr.mxu0 0.0
        %1109 = vmatpush1.xpose.msra.mxu0 0.0
        %1110 = vmatprep.subr.mxu0 0.0
        %1111 = vmatpush1.xpose.msra.mxu0 0.0
        %1112 = vmatprep.subr.mxu0 0.0
        %1113 = vmatpush1.xpose.msra.mxu0 %v1080
        %1114 = vmatprep.subr.mxu0 0.0
        %1115 = vmatpush2.xpose.msra.mxu0 0.0
        %1116 = vmatprep.subr.mxu0 0.0
        %1117 = vmatpush2.xpose.msra.mxu0 0.0
        %1118 = vmatprep.subr.mxu0 0.0
        %1119 = vmatpush2.xpose.msra.mxu0 0.0
        %1120 = vmatprep.subr.mxu0 0.0
        %1121 = vmatpush2.xpose.msra.mxu0 0.0
        %1122 = vmatprep.subr.mxu0 0.0
        %1123 = vmatpush2.xpose.msra.mxu0 0.0
        %1124 = vmatprep.subr.mxu0 0.0
        %1125 = vmatpush2.xpose.msra.mxu0 0.0
        %1126 = vmatprep.subr.mxu0 0.0
        %1127 = vmatpush2.xpose.msra.mxu0 0.0
        %1128 = vmatprep.subr.mxu0 0.0
        %1129 = vmatpush2.xpose.msra.mxu0 0.0
        %1130 = vmatprep.subr.mxu0 0.0
        %1131 = vmatpush2.xpose.msra.mxu0 0.0
        %1132 = vmatprep.subr.mxu0 0.0
        %1133 = vmatpush2.xpose.msra.mxu0 0.0
        %1134 = vmatprep.subr.mxu0 0.0
        %1135 = vmatpush2.xpose.msra.mxu0 0.0
        %1136 = vmatprep.subr.mxu0 0.0
        %1137 = vmatpush2.xpose.msra.mxu0 0.0
        %1138 = vmatprep.subr.mxu0 0.0
        %1139 = vmatpush2.xpose.msra.mxu0 0.0
        %1140 = vmatprep.subr.mxu0 0.0
        %1141 = vmatpush2.xpose.msra.mxu0 0.0
        %1142 = vmatprep.subr.mxu0 0.0
        %1143 = vmatpush2.xpose.msra.mxu0 0.0
        %1144 = vmatprep.subr.mxu0 0.0
        %1145 = vmatpush2.xpose.msra.mxu0 0.0
        %1146 = vmatprep.mubr.f32.mxu0 0.0
        %1147 = vmatmul.mubr.f32.gmra.mxu0 %v1077
        %v1148 = vpop.f32.mrf.mxu0
        %v1149 = vadd.f32 0.0, %v1148
        %v1150 = vpop.f32.mrf.mxu0
        %1151 = vdwg.mxu0
        %v1152 = vmul.f32 %v921, 0.35355338
        %v1153 = vmul.f32 %v997, 0.35355338
        %v1154 = vmul.f32 %v1073, 0.35355338
        %v1155 = vmul.f32 %v1149, 0.35355338
        %v1156 = vsel %vm847, %v1152, -inf
        %1157 = vmax.xlane.f32.xlu0 %v1156
        %v1158 = vpop.xlane.xlu0 %1157
        %v1159 = vsel %vm847, %v1153, -inf
        %1160 = vmax.xlane.f32.xlu0 %v1159
        %v1161 = vpop.xlane.xlu0 %1160
        %v1162 = vsel %vm847, %v1154, -inf
        %1163 = vmax.xlane.f32.xlu0 %v1162
        %v1164 = vpop.xlane.xlu0 %1163
        %v1165 = vsel %vm847, %v1155, -inf
        %1166 = vmax.xlane.f32.xlu0 %v1165
        %v1167 = vpop.xlane.xlu0 %1166
        %v1168 = vsub.f32 %v1152, %v1158
        %v1169 = vsub.f32 %v1153, %v1161
        %v1170 = vsub.f32 %v1154, %v1164
        %v1171 = vsub.f32 %v1155, %v1167
        %v1172 = vmul.f32 %v1168, 1.442695
        %v1173 = vpow.pop %v1172
        %v1174 = vmul.f32 %v1169, 1.442695
        %v1175 = vpow.pop %v1174
        %v1176 = vmul.f32 %v1170, 1.442695
        %v1177 = vpow.pop %v1176
        %v1178 = vmul.f32 %v1171, 1.442695
        %v1179 = vpow.pop %v1178
        %v1180 = vsel %vm847, %v1173, 0.0
        %1181 = vadd.xlane.f32.xlu0 %v1180
        %v1182 = vpop.xlane.xlu0 %1181
        %v1183 = vsel %vm847, %v1175, 0.0
        %1184 = vadd.xlane.f32.xlu0 %v1183
        %v1185 = vpop.xlane.xlu0 %1184
        %v1186 = vsel %vm847, %v1177, 0.0
        %1187 = vadd.xlane.f32.xlu0 %v1186
        %v1188 = vpop.xlane.xlu0 %1187
        %v1189 = vsel %vm847, %v1179, 0.0
        %1190 = vadd.xlane.f32.xlu0 %v1189
        %v1191 = vpop.xlane.xlu0 %1190
        %v1193 = vsel %vm847, %v1173, 0
        %1195 = vmatprep.subr.mxu0 0.0
        %1196 = vmatpush1.msra.mxu0 0.0
        %1197 = vmatprep.subr.mxu0 0.0
        %1198 = vmatpush1.msra.mxu0 0.0
        %1199 = vmatprep.subr.mxu0 0.0
        %1200 = vmatpush1.msra.mxu0 0.0
        %1201 = vmatprep.subr.mxu0 0.0
        %1202 = vmatpush1.msra.mxu0 0.0
        %1203 = vmatprep.subr.mxu0 0.0
        %1204 = vmatpush1.msra.mxu0 0.0
        %1205 = vmatprep.subr.mxu0 0.0
        %1206 = vmatpush1.msra.mxu0 0.0
        %1207 = vmatprep.subr.mxu0 0.0
        %1208 = vmatpush1.msra.mxu0 0.0
        %1209 = vmatprep.subr.mxu0 0.0
        %1210 = vmatpush1.msra.mxu0 0.0
        %1211 = vmatprep.subr.mxu0 0.0
        %1212 = vmatpush1.msra.mxu0 0.0
        %1213 = vmatprep.subr.mxu0 0.0
        %1214 = vmatpush1.msra.mxu0 0.0
        %1215 = vmatprep.subr.mxu0 0.0
        %1216 = vmatpush1.msra.mxu0 0.0
        %1217 = vmatprep.subr.mxu0 0.0
        %1218 = vmatpush1.msra.mxu0 0.0
        %1219 = vmatprep.subr.mxu0 0.0
        %1220 = vmatpush1.msra.mxu0 0.0
        %1221 = vmatprep.subr.mxu0 0.0
        %1222 = vmatpush1.msra.mxu0 0.0
        %1223 = vmatprep.subr.mxu0 0.0
        %1224 = vmatpush1.msra.mxu0 0.0
        %1225 = vmatprep.subr.mxu0 0.0
        %1226 = vmatpush1.msra.mxu0 %v735
        %1227 = vmatprep.subr.mxu0 0.0
        %1228 = vmatpush2.msra.mxu0 0.0
        %1229 = vmatprep.subr.mxu0 0.0
        %1230 = vmatpush2.msra.mxu0 0.0
        %1231 = vmatprep.subr.mxu0 0.0
        %1232 = vmatpush2.msra.mxu0 0.0
        %1233 = vmatprep.subr.mxu0 0.0
        %1234 = vmatpush2.msra.mxu0 0.0
        %1235 = vmatprep.subr.mxu0 0.0
        %1236 = vmatpush2.msra.mxu0 0.0
        %1237 = vmatprep.subr.mxu0 0.0
        %1238 = vmatpush2.msra.mxu0 0.0
        %1239 = vmatprep.subr.mxu0 0.0
        %1240 = vmatpush2.msra.mxu0 0.0
        %1241 = vmatprep.subr.mxu0 0.0
        %1242 = vmatpush2.msra.mxu0 0.0
        %1243 = vmatprep.subr.mxu0 0.0
        %1244 = vmatpush2.msra.mxu0 0.0
        %1245 = vmatprep.subr.mxu0 0.0
        %1246 = vmatpush2.msra.mxu0 0.0
        %1247 = vmatprep.subr.mxu0 0.0
        %1248 = vmatpush2.msra.mxu0 0.0
        %1249 = vmatprep.subr.mxu0 0.0
        %1250 = vmatpush2.msra.mxu0 0.0
        %1251 = vmatprep.subr.mxu0 0.0
        %1252 = vmatpush2.msra.mxu0 0.0
        %1253 = vmatprep.subr.mxu0 0.0
        %1254 = vmatpush2.msra.mxu0 0.0
        %1255 = vmatprep.subr.mxu0 0.0
        %1256 = vmatpush2.msra.mxu0 0.0
        %1257 = vmatprep.subr.mxu0 0.0
        %1258 = vmatpush2.msra.mxu0 0.0
        %1259 = vmatprep.mubr.f32.mxu0 0.0
        %1260 = vmatmul.mubr.f32.gmra.mxu0 %v1193
        %v1261 = vpop.f32.mrf.mxu0
        %v1262 = vadd.f32 0.0, %v1261
        %v1263 = vpop.f32.mrf.mxu0
        %1264 = vdwg.mxu0
        %v1266 = vsel %vm847, %v1175, 0
        %1268 = vmatprep.subr.mxu0 0.0
        %1269 = vmatpush1.msra.mxu0 0.0
        %1270 = vmatprep.subr.mxu0 0.0
        %1271 = vmatpush1.msra.mxu0 0.0
        %1272 = vmatprep.subr.mxu0 0.0
        %1273 = vmatpush1.msra.mxu0 0.0
        %1274 = vmatprep.subr.mxu0 0.0
        %1275 = vmatpush1.msra.mxu0 0.0
        %1276 = vmatprep.subr.mxu0 0.0
        %1277 = vmatpush1.msra.mxu0 0.0
        %1278 = vmatprep.subr.mxu0 0.0
        %1279 = vmatpush1.msra.mxu0 0.0
        %1280 = vmatprep.subr.mxu0 0.0
        %1281 = vmatpush1.msra.mxu0 0.0
        %1282 = vmatprep.subr.mxu0 0.0
        %1283 = vmatpush1.msra.mxu0 0.0
        %1284 = vmatprep.subr.mxu0 0.0
        %1285 = vmatpush1.msra.mxu0 0.0
        %1286 = vmatprep.subr.mxu0 0.0
        %1287 = vmatpush1.msra.mxu0 0.0
        %1288 = vmatprep.subr.mxu0 0.0
        %1289 = vmatpush1.msra.mxu0 0.0
        %1290 = vmatprep.subr.mxu0 0.0
        %1291 = vmatpush1.msra.mxu0 0.0
        %1292 = vmatprep.subr.mxu0 0.0
        %1293 = vmatpush1.msra.mxu0 0.0
        %1294 = vmatprep.subr.mxu0 0.0
        %1295 = vmatpush1.msra.mxu0 0.0
        %1296 = vmatprep.subr.mxu0 0.0
        %1297 = vmatpush1.msra.mxu0 0.0
        %1298 = vmatprep.subr.mxu0 0.0
        %1299 = vmatpush1.msra.mxu0 %v767
        %1300 = vmatprep.subr.mxu0 0.0
        %1301 = vmatpush2.msra.mxu0 0.0
        %1302 = vmatprep.subr.mxu0 0.0
        %1303 = vmatpush2.msra.mxu0 0.0
        %1304 = vmatprep.subr.mxu0 0.0
        %1305 = vmatpush2.msra.mxu0 0.0
        %1306 = vmatprep.subr.mxu0 0.0
        %1307 = vmatpush2.msra.mxu0 0.0
        %1308 = vmatprep.subr.mxu0 0.0
        %1309 = vmatpush2.msra.mxu0 0.0
        %1310 = vmatprep.subr.mxu0 0.0
        %1311 = vmatpush2.msra.mxu0 0.0
        %1312 = vmatprep.subr.mxu0 0.0
        %1313 = vmatpush2.msra.mxu0 0.0
        %1314 = vmatprep.subr.mxu0 0.0
        %1315 = vmatpush2.msra.mxu0 0.0
        %1316 = vmatprep.subr.mxu0 0.0
        %1317 = vmatpush2.msra.mxu0 0.0
        %1318 = vmatprep.subr.mxu0 0.0
        %1319 = vmatpush2.msra.mxu0 0.0
        %1320 = vmatprep.subr.mxu0 0.0
        %1321 = vmatpush2.msra.mxu0 0.0
        %1322 = vmatprep.subr.mxu0 0.0
        %1323 = vmatpush2.msra.mxu0 0.0
        %1324 = vmatprep.subr.mxu0 0.0
        %1325 = vmatpush2.msra.mxu0 0.0
        %1326 = vmatprep.subr.mxu0 0.0
        %1327 = vmatpush2.msra.mxu0 0.0
        %1328 = vmatprep.subr.mxu0 0.0
        %1329 = vmatpush2.msra.mxu0 0.0
        %1330 = vmatprep.subr.mxu0 0.0
        %1331 = vmatpush2.msra.mxu0 0.0
        %1332 = vmatprep.mubr.f32.mxu0 0.0
        %1333 = vmatmul.mubr.f32.gmra.mxu0 %v1266
        %v1334 = vpop.f32.mrf.mxu0
        %v1335 = vadd.f32 0.0, %v1334
        %v1336 = vpop.f32.mrf.mxu0
        %1337 = vdwg.mxu0
        %v1339 = vsel %vm847, %v1177, 0
        %1341 = vmatprep.subr.mxu0 0.0
        %1342 = vmatpush1.msra.mxu0 0.0
        %1343 = vmatprep.subr.mxu0 0.0
        %1344 = vmatpush1.msra.mxu0 0.0
        %1345 = vmatprep.subr.mxu0 0.0
        %1346 = vmatpush1.msra.mxu0 0.0
        %1347 = vmatprep.subr.mxu0 0.0
        %1348 = vmatpush1.msra.mxu0 0.0
        %1349 = vmatprep.subr.mxu0 0.0
        %1350 = vmatpush1.msra.mxu0 0.0
        %1351 = vmatprep.subr.mxu0 0.0
        %1352 = vmatpush1.msra.mxu0 0.0
        %1353 = vmatprep.subr.mxu0 0.0
        %1354 = vmatpush1.msra.mxu0 0.0
        %1355 = vmatprep.subr.mxu0 0.0
        %1356 = vmatpush1.msra.mxu0 0.0
        %1357 = vmatprep.subr.mxu0 0.0
        %1358 = vmatpush1.msra.mxu0 0.0
        %1359 = vmatprep.subr.mxu0 0.0
        %1360 = vmatpush1.msra.mxu0 0.0
        %1361 = vmatprep.subr.mxu0 0.0
        %1362 = vmatpush1.msra.mxu0 0.0
        %1363 = vmatprep.subr.mxu0 0.0
        %1364 = vmatpush1.msra.mxu0 0.0
        %1365 = vmatprep.subr.mxu0 0.0
        %1366 = vmatpush1.msra.mxu0 0.0
        %1367 = vmatprep.subr.mxu0 0.0
        %1368 = vmatpush1.msra.mxu0 0.0
        %1369 = vmatprep.subr.mxu0 0.0
        %1370 = vmatpush1.msra.mxu0 0.0
        %1371 = vmatprep.subr.mxu0 0.0
        %1372 = vmatpush1.msra.mxu0 %v799
        %1373 = vmatprep.subr.mxu0 0.0
        %1374 = vmatpush2.msra.mxu0 0.0
        %1375 = vmatprep.subr.mxu0 0.0
        %1376 = vmatpush2.msra.mxu0 0.0
        %1377 = vmatprep.subr.mxu0 0.0
        %1378 = vmatpush2.msra.mxu0 0.0
        %1379 = vmatprep.subr.mxu0 0.0
        %1380 = vmatpush2.msra.mxu0 0.0
        %1381 = vmatprep.subr.mxu0 0.0
        %1382 = vmatpush2.msra.mxu0 0.0
        %1383 = vmatprep.subr.mxu0 0.0
        %1384 = vmatpush2.msra.mxu0 0.0
        %1385 = vmatprep.subr.mxu0 0.0
        %1386 = vmatpush2.msra.mxu0 0.0
        %1387 = vmatprep.subr.mxu0 0.0
        %1388 = vmatpush2.msra.mxu0 0.0
        %1389 = vmatprep.subr.mxu0 0.0
        %1390 = vmatpush2.msra.mxu0 0.0
        %1391 = vmatprep.subr.mxu0 0.0
        %1392 = vmatpush2.msra.mxu0 0.0
        %1393 = vmatprep.subr.mxu0 0.0
        %1394 = vmatpush2.msra.mxu0 0.0
        %1395 = vmatprep.subr.mxu0 0.0
        %1396 = vmatpush2.msra.mxu0 0.0
        %1397 = vmatprep.subr.mxu0 0.0
        %1398 = vmatpush2.msra.mxu0 0.0
        %1399 = vmatprep.subr.mxu0 0.0
        %1400 = vmatpush2.msra.mxu0 0.0
        %1401 = vmatprep.subr.mxu0 0.0
        %1402 = vmatpush2.msra.mxu0 0.0
        %1403 = vmatprep.subr.mxu0 0.0
        %1404 = vmatpush2.msra.mxu0 0.0
        %1405 = vmatprep.mubr.f32.mxu0 0.0
        %1406 = vmatmul.mubr.f32.gmra.mxu0 %v1339
        %v1407 = vpop.f32.mrf.mxu0
        %v1408 = vadd.f32 0.0, %v1407
        %v1409 = vpop.f32.mrf.mxu0
        %1410 = vdwg.mxu0
        %v1412 = vsel %vm847, %v1179, 0
        %1414 = vmatprep.subr.mxu0 0.0
        %1415 = vmatpush1.msra.mxu0 0.0
        %1416 = vmatprep.subr.mxu0 0.0
        %1417 = vmatpush1.msra.mxu0 0.0
        %1418 = vmatprep.subr.mxu0 0.0
        %1419 = vmatpush1.msra.mxu0 0.0
        %1420 = vmatprep.subr.mxu0 0.0
        %1421 = vmatpush1.msra.mxu0 0.0
        %1422 = vmatprep.subr.mxu0 0.0
        %1423 = vmatpush1.msra.mxu0 0.0
        %1424 = vmatprep.subr.mxu0 0.0
        %1425 = vmatpush1.msra.mxu0 0.0
        %1426 = vmatprep.subr.mxu0 0.0
        %1427 = vmatpush1.msra.mxu0 0.0
        %1428 = vmatprep.subr.mxu0 0.0
        %1429 = vmatpush1.msra.mxu0 0.0
        %1430 = vmatprep.subr.mxu0 0.0
        %1431 = vmatpush1.msra.mxu0 0.0
        %1432 = vmatprep.subr.mxu0 0.0
        %1433 = vmatpush1.msra.mxu0 0.0
        %1434 = vmatprep.subr.mxu0 0.0
        %1435 = vmatpush1.msra.mxu0 0.0
        %1436 = vmatprep.subr.mxu0 0.0
        %1437 = vmatpush1.msra.mxu0 0.0
        %1438 = vmatprep.subr.mxu0 0.0
        %1439 = vmatpush1.msra.mxu0 0.0
        %1440 = vmatprep.subr.mxu0 0.0
        %1441 = vmatpush1.msra.mxu0 0.0
        %1442 = vmatprep.subr.mxu0 0.0
        %1443 = vmatpush1.msra.mxu0 0.0
        %1444 = vmatprep.subr.mxu0 0.0
        %1445 = vmatpush1.msra.mxu0 %v831
        %1446 = vmatprep.subr.mxu0 0.0
        %1447 = vmatpush2.msra.mxu0 0.0
        %1448 = vmatprep.subr.mxu0 0.0
        %1449 = vmatpush2.msra.mxu0 0.0
        %1450 = vmatprep.subr.mxu0 0.0
        %1451 = vmatpush2.msra.mxu0 0.0
        %1452 = vmatprep.subr.mxu0 0.0
        %1453 = vmatpush2.msra.mxu0 0.0
        %1454 = vmatprep.subr.mxu0 0.0
        %1455 = vmatpush2.msra.mxu0 0.0
        %1456 = vmatprep.subr.mxu0 0.0
        %1457 = vmatpush2.msra.mxu0 0.0
        %1458 = vmatprep.subr.mxu0 0.0
        %1459 = vmatpush2.msra.mxu0 0.0
        %1460 = vmatprep.subr.mxu0 0.0
        %1461 = vmatpush2.msra.mxu0 0.0
        %1462 = vmatprep.subr.mxu0 0.0
        %1463 = vmatpush2.msra.mxu0 0.0
        %1464 = vmatprep.subr.mxu0 0.0
        %1465 = vmatpush2.msra.mxu0 0.0
        %1466 = vmatprep.subr.mxu0 0.0
        %1467 = vmatpush2.msra.mxu0 0.0
        %1468 = vmatprep.subr.mxu0 0.0
        %1469 = vmatpush2.msra.mxu0 0.0
        %1470 = vmatprep.subr.mxu0 0.0
        %1471 = vmatpush2.msra.mxu0 0.0
        %1472 = vmatprep.subr.mxu0 0.0
        %1473 = vmatpush2.msra.mxu0 0.0
        %1474 = vmatprep.subr.mxu0 0.0
        %1475 = vmatpush2.msra.mxu0 0.0
        %1476 = vmatprep.subr.mxu0 0.0
        %1477 = vmatpush2.msra.mxu0 0.0
        %1478 = vmatprep.mubr.f32.mxu0 0.0
        %1479 = vmatmul.mubr.f32.gmra.mxu0 %v1412
        %v1480 = vpop.f32.mrf.mxu0
        %v1481 = vadd.f32 0.0, %v1480
        %v1482 = vpop.f32.mrf.mxu0
        %1483 = vdwg.mxu0
        %v1484 = vrcp.pop %v1182
        %v1485 = vmul.f32 %v1262, %v1484
        %v1486 = vrcp.pop %v1185
        %v1487 = vmul.f32 %v1335, %v1486
        %v1488 = vrcp.pop %v1188
        %v1489 = vmul.f32 %v1408, %v1488
        %v1490 = vrcp.pop %v1191
        %v1491 = vmul.f32 %v1481, %v1490
        %1492 = vxpose.xlu0.b32.start [1/16] %v1485, 128
        %1493 = vxpose.xlu0.b32.cont [2/16] 0.0, 128
        %1494 = vxpose.xlu0.b32.cont [3/16] 0.0, 128
        %1495 = vxpose.xlu0.b32.cont [4/16] 0.0, 128
        %1496 = vxpose.xlu0.b32.cont [5/16] 0.0, 128
        %1497 = vxpose.xlu0.b32.cont [6/16] 0.0, 128
        %1498 = vxpose.xlu0.b32.cont [7/16] 0.0, 128
        %1499 = vxpose.xlu0.b32.cont [8/16] 0.0, 128
        %1500 = vxpose.xlu0.b32.cont [9/16] 0.0, 128
        %1501 = vxpose.xlu0.b32.cont [10/16] 0.0, 128
        %1502 = vxpose.xlu0.b32.cont [11/16] 0.0, 128
        %1503 = vxpose.xlu0.b32.cont [12/16] 0.0, 128
        %1504 = vxpose.xlu0.b32.cont [13/16] 0.0, 128
        %1505 = vxpose.xlu0.b32.cont [14/16] 0.0, 128
        %1506 = vxpose.xlu0.b32.cont [15/16] 0.0, 128
        %1507 = vxpose.xlu0.b32.end [16/16] 0.0, 128
        %v1508 = vpop.trf.xlu0
        %v1509 = vpop.trf.xlu0
        %v1510 = vpop.trf.xlu0
        %v1511 = vpop.trf.xlu0
        %v1512 = vpop.trf.xlu0
        %v1513 = vpop.trf.xlu0
        %v1514 = vpop.trf.xlu0
        %v1515 = vpop.trf.xlu0
        %v1516 = vpop.trf.xlu0
        %v1517 = vpop.trf.xlu0
        %v1518 = vpop.trf.xlu0
        %v1519 = vpop.trf.xlu0
        %v1520 = vpop.trf.xlu0
        %v1521 = vpop.trf.xlu0
        %v1522 = vpop.trf.xlu0
        %v1523 = vpop.trf.xlu0
        %1524 = vxpose.xlu0.b32.start [1/16] %v1487, 128
        %1525 = vxpose.xlu0.b32.cont [2/16] 0.0, 128
        %1526 = vxpose.xlu0.b32.cont [3/16] 0.0, 128
        %1527 = vxpose.xlu0.b32.cont [4/16] 0.0, 128
        %1528 = vxpose.xlu0.b32.cont [5/16] 0.0, 128
        %1529 = vxpose.xlu0.b32.cont [6/16] 0.0, 128
        %1530 = vxpose.xlu0.b32.cont [7/16] 0.0, 128
        %1531 = vxpose.xlu0.b32.cont [8/16] 0.0, 128
        %1532 = vxpose.xlu0.b32.cont [9/16] 0.0, 128
        %1533 = vxpose.xlu0.b32.cont [10/16] 0.0, 128
        %1534 = vxpose.xlu0.b32.cont [11/16] 0.0, 128
        %1535 = vxpose.xlu0.b32.cont [12/16] 0.0, 128
        %1536 = vxpose.xlu0.b32.cont [13/16] 0.0, 128
        %1537 = vxpose.xlu0.b32.cont [14/16] 0.0, 128
        %1538 = vxpose.xlu0.b32.cont [15/16] 0.0, 128
        %1539 = vxpose.xlu0.b32.end [16/16] 0.0, 128
        %v1540 = vpop.trf.xlu0
        %v1541 = vpop.trf.xlu0
        %v1542 = vpop.trf.xlu0
        %v1543 = vpop.trf.xlu0
        %v1544 = vpop.trf.xlu0
        %v1545 = vpop.trf.xlu0
        %v1546 = vpop.trf.xlu0
        %v1547 = vpop.trf.xlu0
        %v1548 = vpop.trf.xlu0
        %v1549 = vpop.trf.xlu0
        %v1550 = vpop.trf.xlu0
        %v1551 = vpop.trf.xlu0
        %v1552 = vpop.trf.xlu0
        %v1553 = vpop.trf.xlu0
        %v1554 = vpop.trf.xlu0
        %v1555 = vpop.trf.xlu0
        %1556 = vxpose.xlu0.b32.start [1/16] %v1489, 128
        %1557 = vxpose.xlu0.b32.cont [2/16] 0.0, 128
        %1558 = vxpose.xlu0.b32.cont [3/16] 0.0, 128
        %1559 = vxpose.xlu0.b32.cont [4/16] 0.0, 128
        %1560 = vxpose.xlu0.b32.cont [5/16] 0.0, 128
        %1561 = vxpose.xlu0.b32.cont [6/16] 0.0, 128
        %1562 = vxpose.xlu0.b32.cont [7/16] 0.0, 128
        %1563 = vxpose.xlu0.b32.cont [8/16] 0.0, 128
        %1564 = vxpose.xlu0.b32.cont [9/16] 0.0, 128
        %1565 = vxpose.xlu0.b32.cont [10/16] 0.0, 128
        %1566 = vxpose.xlu0.b32.cont [11/16] 0.0, 128
        %1567 = vxpose.xlu0.b32.cont [12/16] 0.0, 128
        %1568 = vxpose.xlu0.b32.cont [13/16] 0.0, 128
        %1569 = vxpose.xlu0.b32.cont [14/16] 0.0, 128
        %1570 = vxpose.xlu0.b32.cont [15/16] 0.0, 128
        %1571 = vxpose.xlu0.b32.end [16/16] 0.0, 128
        %v1572 = vpop.trf.xlu0
        %v1573 = vpop.trf.xlu0
        %v1574 = vpop.trf.xlu0
        %v1575 = vpop.trf.xlu0
        %v1576 = vpop.trf.xlu0
        %v1577 = vpop.trf.xlu0
        %v1578 = vpop.trf.xlu0
        %v1579 = vpop.trf.xlu0
        %v1580 = vpop.trf.xlu0
        %v1581 = vpop.trf.xlu0
        %v1582 = vpop.trf.xlu0
        %v1583 = vpop.trf.xlu0
        %v1584 = vpop.trf.xlu0
        %v1585 = vpop.trf.xlu0
        %v1586 = vpop.trf.xlu0
        %v1587 = vpop.trf.xlu0
        %1588 = vxpose.xlu0.b32.start [1/16] %v1491, 128
        %1589 = vxpose.xlu0.b32.cont [2/16] 0.0, 128
        %1590 = vxpose.xlu0.b32.cont [3/16] 0.0, 128
        %1591 = vxpose.xlu0.b32.cont [4/16] 0.0, 128
        %1592 = vxpose.xlu0.b32.cont [5/16] 0.0, 128
        %1593 = vxpose.xlu0.b32.cont [6/16] 0.0, 128
        %1594 = vxpose.xlu0.b32.cont [7/16] 0.0, 128
        %1595 = vxpose.xlu0.b32.cont [8/16] 0.0, 128
        %1596 = vxpose.xlu0.b32.cont [9/16] 0.0, 128
        %1597 = vxpose.xlu0.b32.cont [10/16] 0.0, 128
        %1598 = vxpose.xlu0.b32.cont [11/16] 0.0, 128
        %1599 = vxpose.xlu0.b32.cont [12/16] 0.0, 128
        %1600 = vxpose.xlu0.b32.cont [13/16] 0.0, 128
        %1601 = vxpose.xlu0.b32.cont [14/16] 0.0, 128
        %1602 = vxpose.xlu0.b32.cont [15/16] 0.0, 128
        %1603 = vxpose.xlu0.b32.end [16/16] 0.0, 128
        %v1604 = vpop.trf.xlu0
        %v1605 = vpop.trf.xlu0
        %v1606 = vpop.trf.xlu0
        %v1607 = vpop.trf.xlu0
        %v1608 = vpop.trf.xlu0
        %v1609 = vpop.trf.xlu0
        %v1610 = vpop.trf.xlu0
        %v1611 = vpop.trf.xlu0
        %v1612 = vpop.trf.xlu0
        %v1613 = vpop.trf.xlu0
        %v1614 = vpop.trf.xlu0
        %v1615 = vpop.trf.xlu0
        %v1616 = vpop.trf.xlu0
        %v1617 = vpop.trf.xlu0
        %v1618 = vpop.trf.xlu0
        %v1619 = vpop.trf.xlu0
        %1620 = vxpose.xlu0.b32.start [1/16] %v1508, 128
        %1621 = vxpose.xlu0.b32.cont [2/16] %v1540, 128
        %1622 = vxpose.xlu0.b32.cont [3/16] %v1572, 128
        %1623 = vxpose.xlu0.b32.cont [4/16] %v1604, 128
        %1624 = vxpose.xlu0.b32.cont [5/16] 0.0, 128
        %1625 = vxpose.xlu0.b32.cont [6/16] 0.0, 128
        %1626 = vxpose.xlu0.b32.cont [7/16] 0.0, 128
        %1627 = vxpose.xlu0.b32.cont [8/16] 0.0, 128
        %1628 = vxpose.xlu0.b32.cont [9/16] 0.0, 128
        %1629 = vxpose.xlu0.b32.cont [10/16] 0.0, 128
        %1630 = vxpose.xlu0.b32.cont [11/16] 0.0, 128
        %1631 = vxpose.xlu0.b32.cont [12/16] 0.0, 128
        %1632 = vxpose.xlu0.b32.cont [13/16] 0.0, 128
        %1633 = vxpose.xlu0.b32.cont [14/16] 0.0, 128
        %1634 = vxpose.xlu0.b32.cont [15/16] 0.0, 128
        %1635 = vxpose.xlu0.b32.end [16/16] 0.0, 128
        %v1636 = vpop.trf.xlu0
        %v1637 = vpop.trf.xlu0
        %v1638 = vpop.trf.xlu0
        %v1639 = vpop.trf.xlu0
        %v1640 = vpop.trf.xlu0
        %v1641 = vpop.trf.xlu0
        %v1642 = vpop.trf.xlu0
        %v1643 = vpop.trf.xlu0
        %v1644 = vpop.trf.xlu0
        %v1645 = vpop.trf.xlu0
        %v1646 = vpop.trf.xlu0
        %v1647 = vpop.trf.xlu0
        %v1648 = vpop.trf.xlu0
        %v1649 = vpop.trf.xlu0
        %v1650 = vpop.trf.xlu0
        %v1651 = vpop.trf.xlu0
        %v1652 = vld [vmem:[%s2] sm:$0xff]
        %v1653 = vld [vmem:[%s2 + $0x8] sm:$0xff]
        %v1654 = vld [vmem:[%s2 + $0x10] sm:$0xff]
        %v1655 = vld [vmem:[%s2 + $0x18] sm:$0xff]
        %v1656 = vld [vmem:[#allocation7 + $0x1] sm:$0x1]
        %v1657 = vlaneseq
        %v1658 = vshrl.u32 %v1657, 7
        %v1659 = vsub.s32 0, %v1658
        %v1660 = vrot.slane %v1656, %v1659
        %v1662 = vsel %vm324, %v1636, 0
        %1664 = vmatprep.subr.mxu0 0.0
        %1665 = vmatpush1.msra.mxu0 0.0
        %1666 = vmatprep.subr.mxu0 0.0
        %1667 = vmatpush1.msra.mxu0 0.0
        %1668 = vmatprep.subr.mxu0 0.0
        %1669 = vmatpush1.msra.mxu0 0.0
        %1670 = vmatprep.subr.mxu0 0.0
        %1671 = vmatpush1.msra.mxu0 0.0
        %1672 = vmatprep.subr.mxu0 0.0
        %1673 = vmatpush1.msra.mxu0 0.0
        %1674 = vmatprep.subr.mxu0 0.0
        %1675 = vmatpush1.msra.mxu0 0.0
        %1676 = vmatprep.subr.mxu0 0.0
        %1677 = vmatpush1.msra.mxu0 0.0
        %1678 = vmatprep.subr.mxu0 0.0
        %1679 = vmatpush1.msra.mxu0 0.0
        %1680 = vmatprep.subr.mxu0 0.0
        %1681 = vmatpush1.msra.mxu0 0.0
        %1682 = vmatprep.subr.mxu0 0.0
        %1683 = vmatpush1.msra.mxu0 0.0
        %1684 = vmatprep.subr.mxu0 0.0
        %1685 = vmatpush1.msra.mxu0 0.0
        %1686 = vmatprep.subr.mxu0 0.0
        %1687 = vmatpush1.msra.mxu0 0.0
        %1688 = vmatprep.subr.mxu0 0.0
        %1689 = vmatpush1.msra.mxu0 %v1655
        %1690 = vmatprep.subr.mxu0 0.0
        %1691 = vmatpush1.msra.mxu0 %v1654
        %1692 = vmatprep.subr.mxu0 0.0
        %1693 = vmatpush1.msra.mxu0 %v1653
        %1694 = vmatprep.subr.mxu0 0.0
        %1695 = vmatpush1.msra.mxu0 %v1652
        %1696 = vmatprep.subr.mxu0 0.0
        %1697 = vmatpush2.msra.mxu0 0.0
        %1698 = vmatprep.subr.mxu0 0.0
        %1699 = vmatpush2.msra.mxu0 0.0
        %1700 = vmatprep.subr.mxu0 0.0
        %1701 = vmatpush2.msra.mxu0 0.0
        %1702 = vmatprep.subr.mxu0 0.0
        %1703 = vmatpush2.msra.mxu0 0.0
        %1704 = vmatprep.subr.mxu0 0.0
        %1705 = vmatpush2.msra.mxu0 0.0
        %1706 = vmatprep.subr.mxu0 0.0
        %1707 = vmatpush2.msra.mxu0 0.0
        %1708 = vmatprep.subr.mxu0 0.0
        %1709 = vmatpush2.msra.mxu0 0.0
        %1710 = vmatprep.subr.mxu0 0.0
        %1711 = vmatpush2.msra.mxu0 0.0
        %1712 = vmatprep.subr.mxu0 0.0
        %1713 = vmatpush2.msra.mxu0 0.0
        %1714 = vmatprep.subr.mxu0 0.0
        %1715 = vmatpush2.msra.mxu0 0.0
        %1716 = vmatprep.subr.mxu0 0.0
        %1717 = vmatpush2.msra.mxu0 0.0
        %1718 = vmatprep.subr.mxu0 0.0
        %1719 = vmatpush2.msra.mxu0 0.0
        %1720 = vmatprep.subr.mxu0 0.0
        %1721 = vmatpush2.msra.mxu0 0.0
        %1722 = vmatprep.subr.mxu0 0.0
        %1723 = vmatpush2.msra.mxu0 0.0
        %1724 = vmatprep.subr.mxu0 0.0
        %1725 = vmatpush2.msra.mxu0 0.0
        %1726 = vmatprep.subr.mxu0 0.0
        %1727 = vmatpush2.msra.mxu0 0.0
        %1728 = vmatprep.mubr.f32.mxu0 0.0
        %1729 = vmatmul.mubr.f32.gmra.mxu0 %v1662
        %v1730 = vpop.f32.mrf.mxu0
        %v1731 = vadd.f32 %v1660, %v1730
        %v1732 = vpop.f32.mrf.mxu0
        %1733 = vdwg.mxu0
        %v1734 = vadd.f32 %v319, %v1731
        %v1735 = vsel %vm324, %v1734, 0.0
        %1736 = vadd.xlane.f32.xlu0 %v1735
        %v1737 = vpop.xlane.xlu0 %1736
        %v1738 = vmul.f32 %v1737, %v328
        %v1739 = vsub.f32 %v1734, %v1738
        %v1740 = vmul.f32 %v1739, %v1739
        %v1741 = vsel %vm324, %v1740, 0.0
        %1742 = vadd.xlane.f32.xlu0 %v1741
        %v1743 = vpop.xlane.xlu0 %1742
        %v1744 = vmul.f32 %v1743, %v328
        %v1745 = vadd.f32 %v1744, 1e-06
        %v1746 = vrsqrt.pop %v1745
        %v1747 = vmul.f32 %v1739, %v1746
        %v1748 = vlaneseq
        %v1749 = vshrl.u32 %v1748, 7
        %v1750 = vsub.s32 0, %v1749
        %v1751 = vrot.slane %v322, %v1750
        %v1752 = vmul.f32 %v1747, %v1751
        %v1753 = vlaneseq
        %v1754 = vshrl.u32 %v1753, 7
        %v1755 = vsub.s32 0, %v1754
        %v1756 = vrot.slane %v323, %v1755
        %v1757 = vadd.f32 %v1752, %v1756
        %v1758 = vld [vmem:[%s3] sm:$0xff]
        %v1759 = vld [vmem:[%s3 + $0x8] sm:$0xff]
        %v1760 = vld [vmem:[%s3 + $0x10] sm:$0xff]
        %v1761 = vld [vmem:[%s3 + $0x18] sm:$0xff]
        %v1762 = vld [vmem:[#allocation7 + $0x2] sm:$0x1]
        %v1763 = vlaneseq
        %v1764 = vshrl.u32 %v1763, 7
        %v1765 = vsub.s32 0, %v1764
        %v1766 = vrot.slane %v1762, %v1765
        %v1768 = vsel %vm324, %v1757, 0
        %1770 = vmatprep.subr.mxu0 0.0
        %1771 = vmatpush1.msra.mxu0 0.0
        %1772 = vmatprep.subr.mxu0 0.0
        %1773 = vmatpush1.msra.mxu0 0.0
        %1774 = vmatprep.subr.mxu0 0.0
        %1775 = vmatpush1.msra.mxu0 0.0
        %1776 = vmatprep.subr.mxu0 0.0
        %1777 = vmatpush1.msra.mxu0 0.0
        %1778 = vmatprep.subr.mxu0 0.0
        %1779 = vmatpush1.msra.mxu0 0.0
        %1780 = vmatprep.subr.mxu0 0.0
        %1781 = vmatpush1.msra.mxu0 0.0
        %1782 = vmatprep.subr.mxu0 0.0
        %1783 = vmatpush1.msra.mxu0 0.0
        %1784 = vmatprep.subr.mxu0 0.0
        %1785 = vmatpush1.msra.mxu0 0.0
        %1786 = vmatprep.subr.mxu0 0.0
        %1787 = vmatpush1.msra.mxu0 0.0
        %1788 = vmatprep.subr.mxu0 0.0
        %1789 = vmatpush1.msra.mxu0 0.0
        %1790 = vmatprep.subr.mxu0 0.0
        %1791 = vmatpush1.msra.mxu0 0.0
        %1792 = vmatprep.subr.mxu0 0.0
        %1793 = vmatpush1.msra.mxu0 0.0
        %1794 = vmatprep.subr.mxu0 0.0
        %1795 = vmatpush1.msra.mxu0 %v1761
        %1796 = vmatprep.subr.mxu0 0.0
        %1797 = vmatpush1.msra.mxu0 %v1760
        %1798 = vmatprep.subr.mxu0 0.0
        %1799 = vmatpush1.msra.mxu0 %v1759
        %1800 = vmatprep.subr.mxu0 0.0
        %1801 = vmatpush1.msra.mxu0 %v1758
        %1802 = vmatprep.subr.mxu0 0.0
        %1803 = vmatpush2.msra.mxu0 0.0
        %1804 = vmatprep.subr.mxu0 0.0
        %1805 = vmatpush2.msra.mxu0 0.0
        %1806 = vmatprep.subr.mxu0 0.0
        %1807 = vmatpush2.msra.mxu0 0.0
        %1808 = vmatprep.subr.mxu0 0.0
        %1809 = vmatpush2.msra.mxu0 0.0
        %1810 = vmatprep.subr.mxu0 0.0
        %1811 = vmatpush2.msra.mxu0 0.0
        %1812 = vmatprep.subr.mxu0 0.0
        %1813 = vmatpush2.msra.mxu0 0.0
        %1814 = vmatprep.subr.mxu0 0.0
        %1815 = vmatpush2.msra.mxu0 0.0
        %1816 = vmatprep.subr.mxu0 0.0
        %1817 = vmatpush2.msra.mxu0 0.0
        %1818 = vmatprep.subr.mxu0 0.0
        %1819 = vmatpush2.msra.mxu0 0.0
        %1820 = vmatprep.subr.mxu0 0.0
        %1821 = vmatpush2.msra.mxu0 0.0
        %1822 = vmatprep.subr.mxu0 0.0
        %1823 = vmatpush2.msra.mxu0 0.0
        %1824 = vmatprep.subr.mxu0 0.0
        %1825 = vmatpush2.msra.mxu0 0.0
        %1826 = vmatprep.subr.mxu0 0.0
        %1827 = vmatpush2.msra.mxu0 0.0
        %1828 = vmatprep.subr.mxu0 0.0
        %1829 = vmatpush2.msra.mxu0 0.0
        %1830 = vmatprep.subr.mxu0 0.0
        %1831 = vmatpush2.msra.mxu0 0.0
        %1832 = vmatprep.subr.mxu0 0.0
        %1833 = vmatpush2.msra.mxu0 0.0
        %1834 = vmatprep.mubr.f32.mxu0 0.0
        %1835 = vmatmul.mubr.f32.gmra.mxu0 %v1768
        %v1836 = vpop.f32.mrf.mxu0
        %v1837 = vadd.f32 %v1766, %v1836
        %v1838 = vpop.f32.mrf.mxu0
        %1839 = vdwg.mxu0
        %v1840 = vmul.f32 %v1837, 0.5
        %v1841 = vmul.f32 %v1837, 0.044715
        %v1842 = vmul.f32 %v1841, %v1837
        %v1843 = vmul.f32 %v1842, %v1837
        %v1844 = vadd.f32 %v1837, %v1843
        %v1845 = vmul.f32 %v1844, 0.7978846
        %v1846 = vtanh.pop %v1845
        %v1847 = vadd.f32 %v1846, 1.0
        %v1848 = vmul.f32 %v1840, %v1847
        %v1849 = vld [vmem:[%s4] sm:$0xff]
        %v1850 = vld [vmem:[%s4 + $0x8] sm:$0xff]
        %v1851 = vld [vmem:[%s4 + $0x10] sm:$0xff]
        %v1852 = vld [vmem:[%s4 + $0x18] sm:$0xff]
        %v1853 = vld [vmem:[%s4 + $0x20] sm:$0xff]
        %v1854 = vld [vmem:[%s4 + $0x28] sm:$0xff]
        %v1855 = vld [vmem:[%s4 + $0x30] sm:$0xff]
        %v1856 = vld [vmem:[%s4 + $0x38] sm:$0xff]
        %vm1857 = vcmask 523264
        %v1859 = vsel %vm1857, %v1848, 0
        %1861 = vmatprep.subr.mxu0 0.0
        %1862 = vmatpush1.msra.mxu0 0.0
        %1863 = vmatprep.subr.mxu0 0.0
        %1864 = vmatpush1.msra.mxu0 0.0
        %1865 = vmatprep.subr.mxu0 0.0
        %1866 = vmatpush1.msra.mxu0 0.0
        %1867 = vmatprep.subr.mxu0 0.0
        %1868 = vmatpush1.msra.mxu0 0.0
        %1869 = vmatprep.subr.mxu0 0.0
        %1870 = vmatpush1.msra.mxu0 0.0
        %1871 = vmatprep.subr.mxu0 0.0
        %1872 = vmatpush1.msra.mxu0 0.0
        %1873 = vmatprep.subr.mxu0 0.0
        %1874 = vmatpush1.msra.mxu0 0.0
        %1875 = vmatprep.subr.mxu0 0.0
        %1876 = vmatpush1.msra.mxu0 0.0
        %1877 = vmatprep.subr.mxu0 0.0
        %1878 = vmatpush1.msra.mxu0 %v1856
        %1879 = vmatprep.subr.mxu0 0.0
        %1880 = vmatpush1.msra.mxu0 %v1855
        %1881 = vmatprep.subr.mxu0 0.0
        %1882 = vmatpush1.msra.mxu0 %v1854
        %1883 = vmatprep.subr.mxu0 0.0
        %1884 = vmatpush1.msra.mxu0 %v1853
        %1885 = vmatprep.subr.mxu0 0.0
        %1886 = vmatpush1.msra.mxu0 %v1852
        %1887 = vmatprep.subr.mxu0 0.0
        %1888 = vmatpush1.msra.mxu0 %v1851
        %1889 = vmatprep.subr.mxu0 0.0
        %1890 = vmatpush1.msra.mxu0 %v1850
        %1891 = vmatprep.subr.mxu0 0.0
        %1892 = vmatpush1.msra.mxu0 %v1849
        %1893 = vmatprep.subr.mxu0 0.0
        %1894 = vmatpush2.msra.mxu0 0.0
        %1895 = vmatprep.subr.mxu0 0.0
        %1896 = vmatpush2.msra.mxu0 0.0
        %1897 = vmatprep.subr.mxu0 0.0
        %1898 = vmatpush2.msra.mxu0 0.0
        %1899 = vmatprep.subr.mxu0 0.0
        %1900 = vmatpush2.msra.mxu0 0.0
        %1901 = vmatprep.subr.mxu0 0.0
        %1902 = vmatpush2.msra.mxu0 0.0
        %1903 = vmatprep.subr.mxu0 0.0
        %1904 = vmatpush2.msra.mxu0 0.0
        %1905 = vmatprep.subr.mxu0 0.0
        %1906 = vmatpush2.msra.mxu0 0.0
        %1907 = vmatprep.subr.mxu0 0.0
        %1908 = vmatpush2.msra.mxu0 0.0
        %1909 = vmatprep.subr.mxu0 0.0
        %1910 = vmatpush2.msra.mxu0 0.0
        %1911 = vmatprep.subr.mxu0 0.0
        %1912 = vmatpush2.msra.mxu0 0.0
        %1913 = vmatprep.subr.mxu0 0.0
        %1914 = vmatpush2.msra.mxu0 0.0
        %1915 = vmatprep.subr.mxu0 0.0
        %1916 = vmatpush2.msra.mxu0 0.0
        %1917 = vmatprep.subr.mxu0 0.0
        %1918 = vmatpush2.msra.mxu0 0.0
        %1919 = vmatprep.subr.mxu0 0.0
        %1920 = vmatpush2.msra.mxu0 0.0
        %1921 = vmatprep.subr.mxu0 0.0
        %1922 = vmatpush2.msra.mxu0 0.0
        %1923 = vmatprep.subr.mxu0 0.0
        %1924 = vmatpush2.msra.mxu0 0.0
        %1925 = vmatprep.mubr.f32.mxu0 0.0
        %1926 = vmatmul.mubr.f32.gmra.mxu0 %v1859
        %v1927 = vpop.f32.mrf.mxu0
        %v1928 = vadd.f32 0.0, %v1927
        %v1929 = vpop.f32.mrf.mxu0
        %1930 = vdwg.mxu0
        %v1931 = vadd.f32 %v1734, %v1928
        %v1932 = vld [vmem:[#allocation7 + $0x3] sm:$0x1]
        %v1933 = vlaneseq
        %v1934 = vshrl.u32 %v1933, 7
        %v1935 = vsub.s32 0, %v1934
        %v1936 = vrot.slane %v1932, %v1935
        %v1937 = vadd.f32 %v1931, %v1936
        %1938 = vst.msk [vmem:[%s318] sm:$0xff] %vm324, %v1937
        %s1939 = sand.u32 %s185, 1
        %s1940 = scalar_lea.sflag [#allocation4], %s1939
        %s1941 = sand.u32 %s185, 1
        %s1942 = smul.addr %s1941, 8
        %s1943 = scalar_lea.vmem [#allocation8], %s1942
        // Predicated region
        $region61: #{siglip_encoder_layer.1} parent=47 // pred_check
          %p1944 = pneg %p195
        $region62: #{siglip_encoder_layer.1} parent=47 // pred_check_branch
          %1946 = sbr.rel (%p1944) target = $region64
        $region63: #{siglip_encoder_layer.1} parent=47 // pred_region
          %s1948 = ssub.s32 128, 128
          %1949 = vsyncadd %s1940, %s1948
          %s1950 = smul.addr %s25, 128
          %s1951 = scalar_lea.hbm %s7, %s1950
          %s1953 = sshll.u32 %s1943, 4
          %s1954 = int_to_ptr.vmem [resolvable:$true] %s1953
          %1956 = dma.vmem_to_hbm [thread:$0]  %s1954, 128, %s1951, %s1940
        $region64: #{siglip_encoder_layer.1} parent=47 // pred_fallthru
          _
      $region48: #{siglip_encoder_layer.1} parent=5 // pred_fallthru
        _
      %p1957 = scmp.le.s32.totalorder 2, %s20
      // Predicated region
      $region65: #{siglip_encoder_layer.1} parent=5 // pred_check
        %p1958 = pneg %p1957
      $region66: #{siglip_encoder_layer.1} parent=5 // pred_check_branch
        %1960 = sbr.rel (%p1958) target = $region68
      $region67: #{siglip_encoder_layer.1} parent=5 // pred_region
        %s1961 = ssub.s32 %s20, 2
        // Predicated region
        $region69: #{siglip_encoder_layer.1} parent=67 // pred_check
          %p1962 = pneg %p201
        $region70: #{siglip_encoder_layer.1} parent=67 // pred_check_branch
          %1964 = sbr.rel (%p1962) target = $region72
        $region71: #{siglip_encoder_layer.1} parent=67 // pred_region
          %s1965 = sand.u32 %s186, 1
          %s1966 = scalar_lea.sflag [#allocation4], %s1965
          %s1967 = sand.u32 %s186, 1
          %s1968 = smul.addr %s1967, 8
          %s1969 = scalar_lea.vmem [#allocation8], %s1968
          %1970 = dma.done %s1966, 128
        $region72: #{siglip_encoder_layer.1} parent=67 // pred_fallthru
          _
      $region68: #{siglip_encoder_layer.1} parent=5 // pred_fallthru
        _
    $region6: #{siglip_encoder_layer.1} parent=1 // loop_footer
      %s24 = sadd.s32 1, %s20
    $region7: #{siglip_encoder_layer.1} parent=1 // loop_footer_branch
      %19 = sbr.rel target = $region3
    $region8: #{siglip_encoder_layer.1} parent=1 // loop_exit
      _
    %1971 = vsyncpa [#allocation3], 1
    %s1972 = scalar_lea.sflag [#allocation3], 1
    %1973 = vsyncpa %s1972, 1
    %1974 = vsyncpa [#allocation6], 1
    %1975 = vsyncpa [#allocation4], 1
    %s1976 = scalar_lea.sflag [#allocation4], 1
    %1977 = vsyncpa %s1976, 1

</llo_original>
